<compile_context>
chip_gen: v5e
topology: v5e:2x2
jax: 0.10.0
libtpu: 0.0.40
codegen_flags: <defaults>
</compile_context>

<pallas_src>
import jax
import jax.numpy as jnp
from jax.experimental import pallas as pl
from jax.experimental.pallas import tpu as pltpu

# Small, lane-aligned demo sizes (module defaults: hidden=256, max_length=180, layers=2).
H = 128    # hidden_size
V = 128    # output_size (vocab)
ML = 128   # max_length
L = 2      # num_layers (fixed to 2, matching the module's global)
LANE = 128

# Packed-slab layout requires ML == H == V == LANE in this demo.
assert H == ML == V == LANE


def _rnd16(n):
    """Round rows up to 16 so every bf16 slab section starts on a (16,128) tile boundary."""
    return ((n + 15) // 16) * 16


# ---- packed-slab row offsets (static Python ints, shared by host packer and kernel) ----
# w_lin slab (bf16, lane width LANE):  [ wa (3H,ML) | ba | wc (3H,H) | bc | wout (H,V) | bout ]
OFF_WA = 0
OFF_BA = OFF_WA + _rnd16(3 * H)
OFF_WC = OFF_BA + _rnd16(1)
OFF_BC = OFF_WC + _rnd16(3 * H)
OFF_WOUT = OFF_BC + _rnd16(1)
OFF_BOUT = OFF_WOUT + _rnd16(H)
LIN_ROWS = OFF_BOUT + _rnd16(1)

# w_lstm slab (bf16, lane width 4H):  [ [wih0;whh0] (2H,4H) | b0 | [wih1;whh1] (2H,4H) | b1 ]
OFF_W0 = 0
OFF_B0 = OFF_W0 + _rnd16(2 * H)
OFF_W1 = OFF_B0 + _rnd16(1)
OFF_B1 = OFF_W1 + _rnd16(2 * H)
LSTM_ROWS = OFF_B1 + _rnd16(1)


def attn_decoder_kernel(tok_ref, emb_ref, h_init_ref, c_init_ref, enc_ref,
                        wlin_ref, wlstm_ref, out_ref, h_sc, c_sc):
    # tok_ref:   (T,) int32 in SMEM (scalar prefetch)       -- token id per decode step
    # emb_ref:   (V, H)  f32, resident                      -- embedding table
    # h_init_ref/c_init_ref: (L, H) f32, resident           -- initial LSTM state
    # enc_ref:   (ML, 2H) bf16, resident                    -- encoder outputs
    # wlin_ref:  (LIN_ROWS, LANE) bf16, resident            -- attn / attn_combine / out (+biases)
    # wlstm_ref: (LSTM_ROWS, 4H) bf16, resident             -- LSTM layer 0/1 (+fused biases)
    # out_ref:   (1, 8, LANE) f32 per step                  -- [logp|attn_w|h0n|h1n|c0n|c1n|0|0]
    # h_sc/c_sc: (L, H) f32 VMEM scratch                    -- recurrent state carried across steps
    f32 = jnp.float32
    bf16 = jnp.bfloat16
    t = pl.program_id(0)

    @pl.when(t == 0)
    def _():
        h_sc[...] = h_init_ref[...]
        c_sc[...] = c_init_ref[...]

    # ---- in-kernel embedding gather (token id from SMEM) ----
    tok = tok_ref[t]
    emb = emb_ref[pl.ds(tok, 1), :]                 # (1, H) f32

    h0 = h_sc[0:1, :]
    h1 = h_sc[1:2, :]
    c0 = c_sc[0:1, :]
    c1 = c_sc[1:2, :]

    def dot_bf(a, w):
        # bf16 x bf16 on the MXU, f32 accumulation; activations stay f32 elsewhere.
        return jnp.dot(a.astype(bf16), w, preferred_element_type=f32)

    # ---- attn_weights = softmax(attn(cat(emb, h0, h1))) : split dots, no in-kernel concat
    logits = (dot_bf(emb, wlin_ref[OFF_WA:OFF_WA + H, :])
              + dot_bf(h0, wlin_ref[OFF_WA + H:OFF_WA + 2 * H, :])
              + dot_bf(h1, wlin_ref[OFF_WA + 2 * H:OFF_WA + 3 * H, :])
              + wlin_ref[OFF_BA:OFF_BA + 1, :].astype(f32))          # (1, ML)
    m = jnp.max(logits, axis=-1, keepdims=True)
    e = jnp.exp(logits - m)
    attn_w = e / jnp.sum(e, axis=-1, keepdims=True)                  # exact divide

    # ---- attn_applied = attn_w @ encoder_outputs -> (1, 2H)
    attn_applied = dot_bf(attn_w, enc_ref[...])

    # ---- x = relu(attn_combine(cat(emb, attn_applied))) : split dots
    x = jnp.maximum(
        dot_bf(emb, wlin_ref[OFF_WC:OFF_WC + H, :])
        + dot_bf(attn_applied, wlin_ref[OFF_WC + H:OFF_WC + 3 * H, :])
        + wlin_ref[OFF_BC:OFF_BC + 1, :].astype(f32), 0.0)           # (1, H)

    # ---- 2-layer LSTM, single time step (PyTorch gate order i, f, g, o) ----
    def sigmoid(v):
        # tanh form: stays on the EUP, no VPU divide
        return 0.5 * jnp.tanh(0.5 * v) + 0.5

    def lstm_cell(xin, h_prev, c_prev, w_off, b_off):
        gates = (dot_bf(xin, wlstm_ref[w_off:w_off + H, :])          # x @ W_ih
                 + dot_bf(h_prev, wlstm_ref[w_off + H:w_off + 2 * H, :])  # h @ W_hh
                 + wlstm_ref[b_off:b_off + 1, :].astype(f32))        # (1, 4H)
        i = sigmoid(gates[:, 0:H])
        f = sigmoid(gates[:, H:2 * H])
        g = jnp.tanh(gates[:, 2 * H:3 * H])
        o = sigmoid(gates[:, 3 * H:4 * H])
        c_new = f * c_prev + i * g
        h_new = o * jnp.tanh(c_new)
        return h_new, c_new

    h0n, c0n = lstm_cell(x, h0, c0, OFF_W0, OFF_B0)
    h1n, c1n = lstm_cell(h0n, h1, c1, OFF_W1, OFF_B1)

    # carry the state in VMEM scratch for the next grid step
    h_sc[...] = jnp.concatenate([h0n, h1n], axis=0)
    c_sc[...] = jnp.concatenate([c0n, c1n], axis=0)

    # ---- output = log_softmax(out(h_top)) ----
    ol = (dot_bf(h1n, wlin_ref[OFF_WOUT:OFF_WOUT + H, :])
          + wlin_ref[OFF_BOUT:OFF_BOUT + 1, :].astype(f32))          # (1, V)
    mo = jnp.max(ol, axis=-1, keepdims=True)
    z = ol - mo
    logp = z - jnp.log(jnp.sum(jnp.exp(z), axis=-1, keepdims=True))

    # ---- assemble the per-step output slab in registers, single full-tile store ----
    slab = jnp.concatenate(
        [logp, attn_w, h0n, h1n, c0n, c1n, jnp.zeros((2, LANE), f32)], axis=0)  # (8, LANE)
    out_ref[0] = slab


def init_params(key):
    ks = jax.random.split(key, 13)
    s = 0.1
    return {
        "embedding": s * jax.random.normal(ks[0], (V, H), jnp.float32),
        # attn: Linear(3H -> ML), stored transposed as (3H, ML)
        "wa": s * jax.random.normal(ks[1], (3 * H, ML), jnp.float32),
        "ba": s * jax.random.normal(ks[2], (1, ML), jnp.float32),
        # attn_combine: Linear(3H -> H)
        "wc": s * jax.random.normal(ks[3], (3 * H, H), jnp.float32),
        "bc": s * jax.random.normal(ks[4], (1, H), jnp.float32),
        # LSTM layer 0 / 1 (bias = b_ih + b_hh folded into one (1, 4H) vector)
        "wih0": s * jax.random.normal(ks[5], (H, 4 * H), jnp.float32),
        "whh0": s * jax.random.normal(ks[6], (H, 4 * H), jnp.float32),
        "b0": s * jax.random.normal(ks[7], (1, 4 * H), jnp.float32),
        "wih1": s * jax.random.normal(ks[8], (H, 4 * H), jnp.float32),
        "whh1": s * jax.random.normal(ks[9], (H, 4 * H), jnp.float32),
        "b1": s * jax.random.normal(ks[10], (1, 4 * H), jnp.float32),
        # out: Linear(H -> V)
        "wout": s * jax.random.normal(ks[11], (H, V), jnp.float32),
        "bout": s * jax.random.normal(ks[12], (1, V), jnp.float32),
    }


def pack_params(p):
    """Pack all fixed weights into two lane-dense bf16 slabs. Done once; reused every call."""
    wlin = jnp.zeros((LIN_ROWS, LANE), jnp.float32)
    wlin = wlin.at[OFF_WA:OFF_WA + 3 * H].set(p["wa"])
    wlin = wlin.at[OFF_BA:OFF_BA + 1].set(p["ba"])
    wlin = wlin.at[OFF_WC:OFF_WC + 3 * H].set(p["wc"])
    wlin = wlin.at[OFF_BC:OFF_BC + 1].set(p["bc"])
    wlin = wlin.at[OFF_WOUT:OFF_WOUT + H].set(p["wout"])
    wlin = wlin.at[OFF_BOUT:OFF_BOUT + 1].set(p["bout"])

    wlstm = jnp.zeros((LSTM_ROWS, 4 * H), jnp.float32)
    wlstm = wlstm.at[OFF_W0:OFF_W0 + 2 * H].set(
        jnp.concatenate([p["wih0"], p["whh0"]], axis=0))
    wlstm = wlstm.at[OFF_B0:OFF_B0 + 1].set(p["b0"])
    wlstm = wlstm.at[OFF_W1:OFF_W1 + 2 * H].set(
        jnp.concatenate([p["wih1"], p["whh1"]], axis=0))
    wlstm = wlstm.at[OFF_B1:OFF_B1 + 1].set(p["b1"])
    return wlin.astype(jnp.bfloat16), wlstm.astype(jnp.bfloat16)


def attn_decoder_decode(tokens, h, c, encoder_outputs, params, packed=None):
    """Runs T decode steps (one module forward per token) in a single pallas_call."""
    if packed is None:
        packed = pack_params(params)
    wlin, wlstm = packed

    tokens = jnp.asarray(tokens, jnp.int32)
    T = tokens.shape[0]
    enc_bf = encoder_outputs.astype(jnp.bfloat16)
    emb_tbl = params["embedding"]                       # (V, H) f32, resident in VMEM

    const = lambda t, tok: (0, 0)                       # resident: same block every step
    grid_spec = pltpu.PrefetchScalarGridSpec(
        num_scalar_prefetch=1,                          # token ids -> SMEM
        grid=(T,),
        in_specs=[
            pl.BlockSpec((V, H), const),                # embedding table
            pl.BlockSpec((L, H), const),                # h init
            pl.BlockSpec((L, H), const),                # c init
            pl.BlockSpec((ML, 2 * H), const),           # encoder outputs (bf16)
            pl.BlockSpec((LIN_ROWS, LANE), const),      # packed linears (bf16)
            pl.BlockSpec((LSTM_ROWS, 4 * H), const),    # packed LSTM (bf16)
        ],
        out_specs=pl.BlockSpec((1, 8, LANE), lambda t, tok: (t, 0, 0)),
        scratch_shapes=[pltpu.VMEM((L, H), jnp.float32),   # h carried across steps
                        pltpu.VMEM((L, H), jnp.float32)],  # c carried across steps
    )

    out = pl.pallas_call(
        attn_decoder_kernel,
        out_shape=jax.ShapeDtypeStruct((T, 8, LANE), jnp.float32),
        grid_spec=grid_spec,
        compiler_params=pltpu.CompilerParams(dimension_semantics=("arbitrary",)),
    )(tokens, emb_tbl, h, c, enc_bf, wlin, wlstm)

    logp = out[:, 0, :V]           # (T, V)  per-step log-probabilities
    attn_w = out[:, 1, :ML]        # (T, ML) per-step attention weights
    h_new = out[T - 1, 2:4, :H]    # (L, H)  final hidden state
    c_new = out[T - 1, 4:6, :H]    # (L, H)  final cell state
    return logp, attn_w, h_new, c_new


def reference_step(token, h, c, encoder_outputs, p):
    """Pure-JAX f32 mirror of one PyTorch forward (for validation)."""
    emb = p["embedding"][token].reshape(1, H)
    attn_in = jnp.concatenate([emb, h.reshape(1, L * H)], axis=1)          # (1, 3H)
    attn_w = jax.nn.softmax(attn_in @ p["wa"] + p["ba"], axis=1)           # (1, ML)
    attn_applied = attn_w @ encoder_outputs                                # (1, 2H)
    x = jnp.concatenate([emb, attn_applied], axis=1) @ p["wc"] + p["bc"]
    x = jax.nn.relu(x)

    def cell(xin, hp, cp, wih, whh, b):
        g = xin @ wih + hp @ whh + b
        i, f, gg, o = (jax.nn.sigmoid(g[:, :H]), jax.nn.sigmoid(g[:, H:2 * H]),
                       jnp.tanh(g[:, 2 * H:3 * H]), jax.nn.sigmoid(g[:, 3 * H:]))
        cn = f * cp + i * gg
        return o * jnp.tanh(cn), cn

    h0n, c0n = cell(x, h[0:1], c[0:1], p["wih0"], p["whh0"], p["b0"])
    h1n, c1n = cell(h0n, h[1:2], c[1:2], p["wih1"], p["whh1"], p["b1"])
    logp = jax.nn.log_softmax(h1n @ p["wout"] + p["bout"], axis=1)
    return logp, jnp.concatenate([h0n, h1n], 0), jnp.concatenate([c0n, c1n], 0), attn_w


def reference_decode(tokens, h, c, encoder_outputs, p):
    logps, attns = [], []
    for i in range(tokens.shape[0]):
        logp, h, c, attn_w = reference_step(tokens[i], h, c, encoder_outputs, p)
        logps.append(logp)
        attns.append(attn_w)
    return jnp.concatenate(logps, 0), jnp.concatenate(attns, 0), h, c


if __name__ == "__main__":
    key = jax.random.PRNGKey(0)
    kp, kh, kc, ke, kt = jax.random.split(key, 5)
    params = init_params(kp)
    packed = pack_params(params)   # packed/quantized once; slabs reused across calls

    T = 4                                                        # decode steps in one call
    tokens = jax.random.randint(kt, (T,), 0, V, dtype=jnp.int32)
    h = 0.1 * jax.random.normal(kh, (L, H), jnp.float32)         # initial LSTM hidden state
    c = 0.1 * jax.random.normal(kc, (L, H), jnp.float32)         # initial LSTM cell state
    encoder_outputs = 0.1 * jax.random.normal(ke, (ML, 2 * H), jnp.float32)

    logp, attn_w, h_new, c_new = jax.block_until_ready(
        attn_decoder_decode(tokens, h, c, encoder_outputs, params, packed=packed))

    ref_logp, ref_attn, ref_h, ref_c = reference_decode(tokens, h, c, encoder_outputs, params)

    # Tolerances account for bf16-stored weight slabs / encoder outputs (f32 accumulation);
    # with f32 slabs the kernel matches the reference to ~2e-3.
    checks = [
        ("logp", logp, ref_logp, 1e-2, 1e-2),
        ("attn_w", attn_w, ref_attn, 5e-4, 2e-2),
        ("h", h_new, ref_h, 5e-3, 1e-2),
        ("c", c_new, ref_c, 5e-3, 1e-2),
    ]
    for name, got, want, atol, rtol in checks:
        assert got.shape == want.shape, (name, got.shape, want.shape)
        assert jnp.allclose(got, want, atol=atol, rtol=rtol), f"mismatch vs reference: {name}"

    print("KERNEL_OK")
</pallas_src>

<mosaic_0001>
module attributes {stable_mosaic.version = 11 : i64} {
  func.func @attn_decoder_kernel(%arg0: i32, %arg1: memref<4xi32, #tpu.memory_space<smem>>, %arg2: memref<128x128xf32, #tpu.memory_space<vmem>>, %arg3: memref<2x128xf32, #tpu.memory_space<vmem>>, %arg4: memref<2x128xf32, #tpu.memory_space<vmem>>, %arg5: memref<128x256xbf16, #tpu.memory_space<vmem>>, %arg6: memref<944x128xbf16, #tpu.memory_space<vmem>>, %arg7: memref<544x512xbf16, #tpu.memory_space<vmem>>, %arg8: memref<1x8x128xf32, #tpu.memory_space<vmem>>, %arg9: memref<2x128xf32, #tpu.memory_space<vmem>>, %arg10: memref<2x128xf32, #tpu.memory_space<vmem>>) attributes {dimension_semantics = [#tpu.dimension_semantics<arbitrary>], iteration_bounds = array<i64: 4>, scalar_prefetch = 1 : i64, scratch_operands = 2 : i64, tpu.core_type = #tpu.core_type<tc>, window_params = [{pipeline_mode = #tpu.pipeline_mode<synchronous>, transform_indices = @transform_0, window_bounds = array<i64: 128, 128>}, {pipeline_mode = #tpu.pipeline_mode<synchronous>, transform_indices = @transform_1, window_bounds = array<i64: 2, 128>}, {pipeline_mode = #tpu.pipeline_mode<synchronous>, transform_indices = @transform_2, window_bounds = array<i64: 2, 128>}, {pipeline_mode = #tpu.pipeline_mode<synchronous>, transform_indices = @transform_3, window_bounds = array<i64: 128, 256>}, {pipeline_mode = #tpu.pipeline_mode<synchronous>, transform_indices = @transform_4, window_bounds = array<i64: 944, 128>}, {pipeline_mode = #tpu.pipeline_mode<synchronous>, transform_indices = @transform_5, window_bounds = array<i64: 544, 512>}, {transform_indices = @transform_6, window_bounds = array<i64: 1, 8, 128>}]} {
    %c0_i32 = arith.constant 0 : i32
    %0 = arith.cmpi eq, %arg0, %c0_i32 : i32
    %1 = arith.extui %0 : i1 to i32
    %c0_i32_0 = arith.constant 0 : i32
    %2 = arith.cmpi ne, %1, %c0_i32_0 : i32
    scf.if %2 {
      %c0_72 = arith.constant 0 : index
      %c0_73 = arith.constant 0 : index
      %156 = vector.load %arg3[%c0_72, %c0_73] : memref<2x128xf32, #tpu.memory_space<vmem>>, vector<2x128xf32>
      %c0_74 = arith.constant 0 : index
      %c0_75 = arith.constant 0 : index
      %157 = vector.load %arg9[%c0_74, %c0_75] : memref<2x128xf32, #tpu.memory_space<vmem>>, vector<2x128xf32>
      tpu.vector_store %arg9[%c0_74, %c0_75], %156 {strides = array<i32>} : memref<2x128xf32, #tpu.memory_space<vmem>>, vector<2x128xf32>,
      %c0_76 = arith.constant 0 : index
      %c0_77 = arith.constant 0 : index
      %158 = vector.load %arg4[%c0_76, %c0_77] : memref<2x128xf32, #tpu.memory_space<vmem>>, vector<2x128xf32>
      %c0_78 = arith.constant 0 : index
      %c0_79 = arith.constant 0 : index
      %159 = vector.load %arg10[%c0_78, %c0_79] : memref<2x128xf32, #tpu.memory_space<vmem>>, vector<2x128xf32>
      tpu.vector_store %arg10[%c0_78, %c0_79], %158 {strides = array<i32>} : memref<2x128xf32, #tpu.memory_space<vmem>>, vector<2x128xf32>,
    } else {
    }
    %3 = arith.index_cast %arg0 : i32 to index
    %4 = memref.load %arg1[%3] : memref<4xi32, #tpu.memory_space<smem>>
    %5 = arith.index_cast %4 : i32 to index
    %c0 = arith.constant 0 : index
    %6 = vector.load %arg2[%5, %c0] : memref<128x128xf32, #tpu.memory_space<vmem>>, vector<1x128xf32>
    %c0_1 = arith.constant 0 : index
    %c0_2 = arith.constant 0 : index
    %7 = vector.load %arg9[%c0_1, %c0_2] : memref<2x128xf32, #tpu.memory_space<vmem>>, vector<1x128xf32>
    %c1 = arith.constant 1 : index
    %c0_3 = arith.constant 0 : index
    %8 = vector.load %arg9[%c1, %c0_3] : memref<2x128xf32, #tpu.memory_space<vmem>>, vector<1x128xf32>
    %c0_4 = arith.constant 0 : index
    %c0_5 = arith.constant 0 : index
    %9 = vector.load %arg10[%c0_4, %c0_5] : memref<2x128xf32, #tpu.memory_space<vmem>>, vector<1x128xf32>
    %c1_6 = arith.constant 1 : index
    %c0_7 = arith.constant 0 : index
    %10 = vector.load %arg10[%c1_6, %c0_7] : memref<2x128xf32, #tpu.memory_space<vmem>>, vector<1x128xf32>
    %c0_8 = arith.constant 0 : index
    %c0_9 = arith.constant 0 : index
    %11 = vector.load %arg6[%c0_8, %c0_9] : memref<944x128xbf16, #tpu.memory_space<vmem>>, vector<128x128xbf16>
    %12 = arith.truncf %6 : vector<1x128xf32> to vector<1x128xbf16>
    %cst = arith.constant dense<0.000000e+00> : vector<1x128xf32>
    %13 = tpu.matmul %12, %11, %cst {dimension_numbers = #tpu.dot_dimension_numbers<[1], [0], [0], [1], [0, 0, 1, 1], [], []>} : vector<1x128xbf16>, vector<128x128xbf16>, vector<1x128xf32> -> vector<1x128xf32>
    %c128 = arith.constant 128 : index
    %c0_10 = arith.constant 0 : index
    %14 = vector.load %arg6[%c128, %c0_10] : memref<944x128xbf16, #tpu.memory_space<vmem>>, vector<128x128xbf16>
    %15 = arith.truncf %7 : vector<1x128xf32> to vector<1x128xbf16>
    %cst_11 = arith.constant dense<0.000000e+00> : vector<1x128xf32>
    %16 = tpu.matmul %15, %14, %cst_11 {dimension_numbers = #tpu.dot_dimension_numbers<[1], [0], [0], [1], [0, 0, 1, 1], [], []>} : vector<1x128xbf16>, vector<128x128xbf16>, vector<1x128xf32> -> vector<1x128xf32>
    %17 = arith.addf %13, %16 : vector<1x128xf32>
    %c256 = arith.constant 256 : index
    %c0_12 = arith.constant 0 : index
    %18 = vector.load %arg6[%c256, %c0_12] : memref<944x128xbf16, #tpu.memory_space<vmem>>, vector<128x128xbf16>
    %19 = arith.truncf %8 : vector<1x128xf32> to vector<1x128xbf16>
    %cst_13 = arith.constant dense<0.000000e+00> : vector<1x128xf32>
    %20 = tpu.matmul %19, %18, %cst_13 {dimension_numbers = #tpu.dot_dimension_numbers<[1], [0], [0], [1], [0, 0, 1, 1], [], []>} : vector<1x128xbf16>, vector<128x128xbf16>, vector<1x128xf32> -> vector<1x128xf32>
    %21 = arith.addf %17, %20 : vector<1x128xf32>
    %c384 = arith.constant 384 : index
    %c0_14 = arith.constant 0 : index
    %22 = vector.load %arg6[%c384, %c0_14] : memref<944x128xbf16, #tpu.memory_space<vmem>>, vector<1x128xbf16>
    %23 = arith.extf %22 : vector<1x128xbf16> to vector<1x128xf32>
    %24 = arith.addf %21, %23 : vector<1x128xf32>
    %cst_15 = arith.constant dense<0xFF800000> : vector<1xf32>
    %25 = vector.multi_reduction <maximumf>, %24, %cst_15 [1] : vector<1x128xf32> to vector<1xf32>
    %26 = vector.shape_cast %25 : vector<1xf32> to vector<1x1xf32>
    %27 = vector.broadcast %26 : vector<1x1xf32> to vector<1x128xf32>
    %28 = arith.subf %24, %27 : vector<1x128xf32>
    %29 = math.exp %28 : vector<1x128xf32>
    %cst_16 = arith.constant dense<0.000000e+00> : vector<1xf32>
    %30 = vector.multi_reduction <add>, %29, %cst_16 [1] : vector<1x128xf32> to vector<1xf32>
    %31 = vector.shape_cast %30 : vector<1xf32> to vector<1x1xf32>
    %32 = vector.broadcast %31 : vector<1x1xf32> to vector<1x128xf32>
    %33 = arith.divf %29, %32 : vector<1x128xf32>
    %c0_17 = arith.constant 0 : index
    %c0_18 = arith.constant 0 : index
    %34 = vector.load %arg5[%c0_17, %c0_18] : memref<128x256xbf16, #tpu.memory_space<vmem>>, vector<128x256xbf16>
    %35 = arith.truncf %33 : vector<1x128xf32> to vector<1x128xbf16>
    %cst_19 = arith.constant dense<0.000000e+00> : vector<1x256xf32>
    %36 = tpu.matmul %35, %34, %cst_19 {dimension_numbers = #tpu.dot_dimension_numbers<[1], [0], [0], [1], [0, 0, 1, 1], [], []>} : vector<1x128xbf16>, vector<128x256xbf16>, vector<1x256xf32> -> vector<1x256xf32>
    %c400 = arith.constant 400 : index
    %c0_20 = arith.constant 0 : index
    %37 = vector.load %arg6[%c400, %c0_20] : memref<944x128xbf16, #tpu.memory_space<vmem>>, vector<128x128xbf16>
    %38 = arith.truncf %6 : vector<1x128xf32> to vector<1x128xbf16>
    %cst_21 = arith.constant dense<0.000000e+00> : vector<1x128xf32>
    %39 = tpu.matmul %38, %37, %cst_21 {dimension_numbers = #tpu.dot_dimension_numbers<[1], [0], [0], [1], [0, 0, 1, 1], [], []>} : vector<1x128xbf16>, vector<128x128xbf16>, vector<1x128xf32> -> vector<1x128xf32>
    %c528 = arith.constant 528 : index
    %c0_22 = arith.constant 0 : index
    %40 = vector.load %arg6[%c528, %c0_22] : memref<944x128xbf16, #tpu.memory_space<vmem>>, vector<256x128xbf16>
    %41 = arith.truncf %36 : vector<1x256xf32> to vector<1x256xbf16>
    %cst_23 = arith.constant dense<0.000000e+00> : vector<1x128xf32>
    %42 = tpu.matmul %41, %40, %cst_23 {dimension_numbers = #tpu.dot_dimension_numbers<[1], [0], [0], [1], [0, 0, 1, 1], [], []>} : vector<1x256xbf16>, vector<256x128xbf16>, vector<1x128xf32> -> vector<1x128xf32>
    %43 = arith.addf %39, %42 : vector<1x128xf32>
    %c784 = arith.constant 784 : index
    %c0_24 = arith.constant 0 : index
    %44 = vector.load %arg6[%c784, %c0_24] : memref<944x128xbf16, #tpu.memory_space<vmem>>, vector<1x128xbf16>
    %45 = arith.extf %44 : vector<1x128xbf16> to vector<1x128xf32>
    %46 = arith.addf %43, %45 : vector<1x128xf32>
    %cst_25 = arith.constant 0.000000e+00 : f32
    %47 = vector.broadcast %cst_25 : f32 to vector<1x128xf32>
    %48 = arith.maximumf %46, %47 : vector<1x128xf32>
    %c0_26 = arith.constant 0 : index
    %c0_27 = arith.constant 0 : index
    %49 = vector.load %arg7[%c0_26, %c0_27] : memref<544x512xbf16, #tpu.memory_space<vmem>>, vector<128x512xbf16>
    %50 = arith.truncf %48 : vector<1x128xf32> to vector<1x128xbf16>
    %cst_28 = arith.constant dense<0.000000e+00> : vector<1x512xf32>
    %51 = tpu.matmul %50, %49, %cst_28 {dimension_numbers = #tpu.dot_dimension_numbers<[1], [0], [0], [1], [0, 0, 1, 1], [], []>} : vector<1x128xbf16>, vector<128x512xbf16>, vector<1x512xf32> -> vector<1x512xf32>
    %c128_29 = arith.constant 128 : index
    %c0_30 = arith.constant 0 : index
    %52 = vector.load %arg7[%c128_29, %c0_30] : memref<544x512xbf16, #tpu.memory_space<vmem>>, vector<128x512xbf16>
    %53 = arith.truncf %7 : vector<1x128xf32> to vector<1x128xbf16>
    %cst_31 = arith.constant dense<0.000000e+00> : vector<1x512xf32>
    %54 = tpu.matmul %53, %52, %cst_31 {dimension_numbers = #tpu.dot_dimension_numbers<[1], [0], [0], [1], [0, 0, 1, 1], [], []>} : vector<1x128xbf16>, vector<128x512xbf16>, vector<1x512xf32> -> vector<1x512xf32>
    %55 = arith.addf %51, %54 : vector<1x512xf32>
    %c256_32 = arith.constant 256 : index
    %c0_33 = arith.constant 0 : index
    %56 = vector.load %arg7[%c256_32, %c0_33] : memref<544x512xbf16, #tpu.memory_space<vmem>>, vector<1x512xbf16>
    %57 = arith.extf %56 : vector<1x512xbf16> to vector<1x512xf32>
    %58 = arith.addf %55, %57 : vector<1x512xf32>
    %59 = vector.extract_strided_slice %58 {offsets = [0, 0], sizes = [1, 128], strides = [1, 1]} : vector<1x512xf32> to vector<1x128xf32>
    %cst_34 = arith.constant 5.000000e-01 : f32
    %60 = vector.broadcast %cst_34 : f32 to vector<1x128xf32>
    %61 = arith.mulf %60, %59 : vector<1x128xf32>
    %62 = math.tanh %61 : vector<1x128xf32>
    %cst_35 = arith.constant 5.000000e-01 : f32
    %63 = vector.broadcast %cst_35 : f32 to vector<1x128xf32>
    %64 = arith.mulf %63, %62 : vector<1x128xf32>
    %cst_36 = arith.constant 5.000000e-01 : f32
    %65 = vector.broadcast %cst_36 : f32 to vector<1x128xf32>
    %66 = arith.addf %64, %65 : vector<1x128xf32>
    %67 = vector.extract_strided_slice %58 {offsets = [0, 128], sizes = [1, 128], strides = [1, 1]} : vector<1x512xf32> to vector<1x128xf32>
    %cst_37 = arith.constant 5.000000e-01 : f32
    %68 = vector.broadcast %cst_37 : f32 to vector<1x128xf32>
    %69 = arith.mulf %68, %67 : vector<1x128xf32>
    %70 = math.tanh %69 : vector<1x128xf32>
    %cst_38 = arith.constant 5.000000e-01 : f32
    %71 = vector.broadcast %cst_38 : f32 to vector<1x128xf32>
    %72 = arith.mulf %71, %70 : vector<1x128xf32>
    %cst_39 = arith.constant 5.000000e-01 : f32
    %73 = vector.broadcast %cst_39 : f32 to vector<1x128xf32>
    %74 = arith.addf %72, %73 : vector<1x128xf32>
    %75 = vector.extract_strided_slice %58 {offsets = [0, 256], sizes = [1, 128], strides = [1, 1]} : vector<1x512xf32> to vector<1x128xf32>
    %76 = math.tanh %75 : vector<1x128xf32>
    %77 = vector.extract_strided_slice %58 {offsets = [0, 384], sizes = [1, 128], strides = [1, 1]} : vector<1x512xf32> to vector<1x128xf32>
    %cst_40 = arith.constant 5.000000e-01 : f32
    %78 = vector.broadcast %cst_40 : f32 to vector<1x128xf32>
    %79 = arith.mulf %78, %77 : vector<1x128xf32>
    %80 = math.tanh %79 : vector<1x128xf32>
    %cst_41 = arith.constant 5.000000e-01 : f32
    %81 = vector.broadcast %cst_41 : f32 to vector<1x128xf32>
    %82 = arith.mulf %81, %80 : vector<1x128xf32>
    %cst_42 = arith.constant 5.000000e-01 : f32
    %83 = vector.broadcast %cst_42 : f32 to vector<1x128xf32>
    %84 = arith.addf %82, %83 : vector<1x128xf32>
    %85 = arith.mulf %74, %9 : vector<1x128xf32>
    %86 = arith.mulf %66, %76 : vector<1x128xf32>
    %87 = arith.addf %85, %86 : vector<1x128xf32>
    %88 = math.tanh %87 : vector<1x128xf32>
    %89 = arith.mulf %84, %88 : vector<1x128xf32>
    %c272 = arith.constant 272 : index
    %c0_43 = arith.constant 0 : index
    %90 = vector.load %arg7[%c272, %c0_43] : memref<544x512xbf16, #tpu.memory_space<vmem>>, vector<128x512xbf16>
    %91 = arith.truncf %89 : vector<1x128xf32> to vector<1x128xbf16>
    %cst_44 = arith.constant dense<0.000000e+00> : vector<1x512xf32>
    %92 = tpu.matmul %91, %90, %cst_44 {dimension_numbers = #tpu.dot_dimension_numbers<[1], [0], [0], [1], [0, 0, 1, 1], [], []>} : vector<1x128xbf16>, vector<128x512xbf16>, vector<1x512xf32> -> vector<1x512xf32>
    %c400_45 = arith.constant 400 : index
    %c0_46 = arith.constant 0 : index
    %93 = vector.load %arg7[%c400_45, %c0_46] : memref<544x512xbf16, #tpu.memory_space<vmem>>, vector<128x512xbf16>
    %94 = arith.truncf %8 : vector<1x128xf32> to vector<1x128xbf16>
    %cst_47 = arith.constant dense<0.000000e+00> : vector<1x512xf32>
    %95 = tpu.matmul %94, %93, %cst_47 {dimension_numbers = #tpu.dot_dimension_numbers<[1], [0], [0], [1], [0, 0, 1, 1], [], []>} : vector<1x128xbf16>, vector<128x512xbf16>, vector<1x512xf32> -> vector<1x512xf32>
    %96 = arith.addf %92, %95 : vector<1x512xf32>
    %c528_48 = arith.constant 528 : index
    %c0_49 = arith.constant 0 : index
    %97 = vector.load %arg7[%c528_48, %c0_49] : memref<544x512xbf16, #tpu.memory_space<vmem>>, vector<1x512xbf16>
    %98 = arith.extf %97 : vector<1x512xbf16> to vector<1x512xf32>
    %99 = arith.addf %96, %98 : vector<1x512xf32>
    %100 = vector.extract_strided_slice %99 {offsets = [0, 0], sizes = [1, 128], strides = [1, 1]} : vector<1x512xf32> to vector<1x128xf32>
    %cst_50 = arith.constant 5.000000e-01 : f32
    %101 = vector.broadcast %cst_50 : f32 to vector<1x128xf32>
    %102 = arith.mulf %101, %100 : vector<1x128xf32>
    %103 = math.tanh %102 : vector<1x128xf32>
    %cst_51 = arith.constant 5.000000e-01 : f32
    %104 = vector.broadcast %cst_51 : f32 to vector<1x128xf32>
    %105 = arith.mulf %104, %103 : vector<1x128xf32>
    %cst_52 = arith.constant 5.000000e-01 : f32
    %106 = vector.broadcast %cst_52 : f32 to vector<1x128xf32>
    %107 = arith.addf %105, %106 : vector<1x128xf32>
    %108 = vector.extract_strided_slice %99 {offsets = [0, 128], sizes = [1, 128], strides = [1, 1]} : vector<1x512xf32> to vector<1x128xf32>
    %cst_53 = arith.constant 5.000000e-01 : f32
    %109 = vector.broadcast %cst_53 : f32 to vector<1x128xf32>
    %110 = arith.mulf %109, %108 : vector<1x128xf32>
    %111 = math.tanh %110 : vector<1x128xf32>
    %cst_54 = arith.constant 5.000000e-01 : f32
    %112 = vector.broadcast %cst_54 : f32 to vector<1x128xf32>
    %113 = arith.mulf %112, %111 : vector<1x128xf32>
    %cst_55 = arith.constant 5.000000e-01 : f32
    %114 = vector.broadcast %cst_55 : f32 to vector<1x128xf32>
    %115 = arith.addf %113, %114 : vector<1x128xf32>
    %116 = vector.extract_strided_slice %99 {offsets = [0, 256], sizes = [1, 128], strides = [1, 1]} : vector<1x512xf32> to vector<1x128xf32>
    %117 = math.tanh %116 : vector<1x128xf32>
    %118 = vector.extract_strided_slice %99 {offsets = [0, 384], sizes = [1, 128], strides = [1, 1]} : vector<1x512xf32> to vector<1x128xf32>
    %cst_56 = arith.constant 5.000000e-01 : f32
    %119 = vector.broadcast %cst_56 : f32 to vector<1x128xf32>
    %120 = arith.mulf %119, %118 : vector<1x128xf32>
    %121 = math.tanh %120 : vector<1x128xf32>
    %cst_57 = arith.constant 5.000000e-01 : f32
    %122 = vector.broadcast %cst_57 : f32 to vector<1x128xf32>
    %123 = arith.mulf %122, %121 : vector<1x128xf32>
    %cst_58 = arith.constant 5.000000e-01 : f32
    %124 = vector.broadcast %cst_58 : f32 to vector<1x128xf32>
    %125 = arith.addf %123, %124 : vector<1x128xf32>
    %126 = arith.mulf %115, %10 : vector<1x128xf32>
    %127 = arith.mulf %107, %117 : vector<1x128xf32>
    %128 = arith.addf %126, %127 : vector<1x128xf32>
    %129 = math.tanh %128 : vector<1x128xf32>
    %130 = arith.mulf %125, %129 : vector<1x128xf32>
    %131 = tpu.concatenate %89, %130 in 0 : vector<1x128xf32>, vector<1x128xf32> -> vector<2x128xf32>
    %c0_59 = arith.constant 0 : index
    %c0_60 = arith.constant 0 : index
    %132 = vector.load %arg9[%c0_59, %c0_60] : memref<2x128xf32, #tpu.memory_space<vmem>>, vector<2x128xf32>
    tpu.vector_store %arg9[%c0_59, %c0_60], %131 {strides = array<i32>} : memref<2x128xf32, #tpu.memory_space<vmem>>, vector<2x128xf32>,
    %133 = tpu.concatenate %87, %128 in 0 : vector<1x128xf32>, vector<1x128xf32> -> vector<2x128xf32>
    %c0_61 = arith.constant 0 : index
    %c0_62 = arith.constant 0 : index
    %134 = vector.load %arg10[%c0_61, %c0_62] : memref<2x128xf32, #tpu.memory_space<vmem>>, vector<2x128xf32>
    tpu.vector_store %arg10[%c0_61, %c0_62], %133 {strides = array<i32>} : memref<2x128xf32, #tpu.memory_space<vmem>>, vector<2x128xf32>,
    %c800 = arith.constant 800 : index
    %c0_63 = arith.constant 0 : index
    %135 = vector.load %arg6[%c800, %c0_63] : memref<944x128xbf16, #tpu.memory_space<vmem>>, vector<128x128xbf16>
    %136 = arith.truncf %130 : vector<1x128xf32> to vector<1x128xbf16>
    %cst_64 = arith.constant dense<0.000000e+00> : vector<1x128xf32>
    %137 = tpu.matmul %136, %135, %cst_64 {dimension_numbers = #tpu.dot_dimension_numbers<[1], [0], [0], [1], [0, 0, 1, 1], [], []>} : vector<1x128xbf16>, vector<128x128xbf16>, vector<1x128xf32> -> vector<1x128xf32>
    %c928 = arith.constant 928 : index
    %c0_65 = arith.constant 0 : index
    %138 = vector.load %arg6[%c928, %c0_65] : memref<944x128xbf16, #tpu.memory_space<vmem>>, vector<1x128xbf16>
    %139 = arith.extf %138 : vector<1x128xbf16> to vector<1x128xf32>
    %140 = arith.addf %137, %139 : vector<1x128xf32>
    %cst_66 = arith.constant dense<0xFF800000> : vector<1xf32>
    %141 = vector.multi_reduction <maximumf>, %140, %cst_66 [1] : vector<1x128xf32> to vector<1xf32>
    %142 = vector.shape_cast %141 : vector<1xf32> to vector<1x1xf32>
    %143 = vector.broadcast %142 : vector<1x1xf32> to vector<1x128xf32>
    %144 = arith.subf %140, %143 : vector<1x128xf32>
    %145 = math.exp %144 : vector<1x128xf32>
    %cst_67 = arith.constant dense<0.000000e+00> : vector<1xf32>
    %146 = vector.multi_reduction <add>, %145, %cst_67 [1] : vector<1x128xf32> to vector<1xf32>
    %147 = vector.shape_cast %146 : vector<1xf32> to vector<1x1xf32>
    %148 = math.log %147 : vector<1x1xf32>
    %149 = vector.broadcast %148 : vector<1x1xf32> to vector<1x128xf32>
    %150 = arith.subf %144, %149 : vector<1x128xf32>
    %cst_68 = arith.constant 0.000000e+00 : f32
    %151 = vector.broadcast %cst_68 : f32 to vector<2x128xf32>
    %152 = tpu.concatenate %150, %33, %89, %130, %87, %128, %151 in 0 : vector<1x128xf32>, vector<1x128xf32>, vector<1x128xf32>, vector<1x128xf32>, vector<1x128xf32>, vector<1x128xf32>, vector<2x128xf32> -> vector<8x128xf32>
    %c0_69 = arith.constant 0 : index
    %c0_70 = arith.constant 0 : index
    %c0_71 = arith.constant 0 : index
    %153 = vector.load %arg8[%c0_69, %c0_70, %c0_71] : memref<1x8x128xf32, #tpu.memory_space<vmem>>, vector<1x8x128xf32>
    %154 = vector.shape_cast %153 : vector<1x8x128xf32> to vector<8x128xf32>
    %155 = vector.shape_cast %152 : vector<8x128xf32> to vector<1x8x128xf32>
    tpu.vector_store %arg8[%c0_69, %c0_70, %c0_71], %155 {strides = array<i32>} : memref<1x8x128xf32, #tpu.memory_space<vmem>>, vector<1x8x128xf32>,
    return
  }
  func.func @transform_0(%arg0: i32, %arg1: memref<4xi32, #tpu.memory_space<smem>>) -> (i32, i32) {
    %c0_i32 = arith.constant 0 : i32
    %c0_i32_0 = arith.constant 0 : i32
    %c0_i32_1 = arith.constant 0 : i32
    return %c0_i32, %c0_i32_0 : i32, i32
  }
  func.func @transform_1(%arg0: i32, %arg1: memref<4xi32, #tpu.memory_space<smem>>) -> (i32, i32) {
    %c0_i32 = arith.constant 0 : i32
    %c0_i32_0 = arith.constant 0 : i32
    %c0_i32_1 = arith.constant 0 : i32
    return %c0_i32, %c0_i32_0 : i32, i32
  }
  func.func @transform_2(%arg0: i32, %arg1: memref<4xi32, #tpu.memory_space<smem>>) -> (i32, i32) {
    %c0_i32 = arith.constant 0 : i32
    %c0_i32_0 = arith.constant 0 : i32
    %c0_i32_1 = arith.constant 0 : i32
    return %c0_i32, %c0_i32_0 : i32, i32
  }
  func.func @transform_3(%arg0: i32, %arg1: memref<4xi32, #tpu.memory_space<smem>>) -> (i32, i32) {
    %c0_i32 = arith.constant 0 : i32
    %c0_i32_0 = arith.constant 0 : i32
    %c0_i32_1 = arith.constant 0 : i32
    return %c0_i32, %c0_i32_0 : i32, i32
  }
  func.func @transform_4(%arg0: i32, %arg1: memref<4xi32, #tpu.memory_space<smem>>) -> (i32, i32) {
    %c0_i32 = arith.constant 0 : i32
    %c0_i32_0 = arith.constant 0 : i32
    %c0_i32_1 = arith.constant 0 : i32
    return %c0_i32, %c0_i32_0 : i32, i32
  }
  func.func @transform_5(%arg0: i32, %arg1: memref<4xi32, #tpu.memory_space<smem>>) -> (i32, i32) {
    %c0_i32 = arith.constant 0 : i32
    %c0_i32_0 = arith.constant 0 : i32
    %c0_i32_1 = arith.constant 0 : i32
    return %c0_i32, %c0_i32_0 : i32, i32
  }
  func.func @transform_6(%arg0: i32, %arg1: memref<4xi32, #tpu.memory_space<smem>>) -> (i32, i32, i32) {
    %c0_i32 = arith.constant 0 : i32
    %c0_i32_0 = arith.constant 0 : i32
    %c0_i32_1 = arith.constant 0 : i32
    return %arg0, %c0_i32, %c0_i32_0 : i32, i32, i32
  }
}

</mosaic_0001>

<llo_original>
// kernel: tpu_custom_call.1
$region0: #{tpu_custom_call.1}
  #allocation0 [shape = 'u32[]', space=smem, size = 0x4, offset = 0x4, fixed_abs, tag = 'smem constant byte address 0x4 - core index']
  #allocation1 [shape = 'u32[72,128]{1,0:T(1,128)}', space=vmem, size = 0x9000, scoped, tag = 'internal scratch']
  #allocation2 [shape = 'f32[2,128]{1,0:T(2,128)}', space=vmem, size = 0x400, scoped, tag = 'scratch operand']
  #allocation3 [shape = 'f32[2,128]{1,0:T(2,128)}', space=vmem, size = 0x400, scoped, tag = 'scratch operand']
  #allocation4 [shape = 's32[1]{0}', space=sflag, size = 0x4, scoped, tag = 'scoped memory for tpu_custom_call.1']
  #allocation5 [shape = 'u8[512]{0}', space=smem, size = 0x200, scoped, tag = 'prefetched SMEM operand 0']
  %s0 = inlined_call_operand.hbm [shape: s32[4], index: 0, kind: input, shape index: {}]
  %s1 = inlined_call_operand.hbm [shape: f32[128,128], index: 1, kind: input, shape index: {}]
  %s2 = inlined_call_operand.hbm [shape: f32[2,128], index: 2, kind: input, shape index: {}]
  %s3 = inlined_call_operand.vmem [shape: f32[2,128], index: 3, kind: input, shape index: {}]
  %s4 = inlined_call_operand.hbm [shape: bf16[128,256], index: 4, kind: input, shape index: {}]
  %s5 = inlined_call_operand.hbm [shape: bf16[944,128], index: 5, kind: input, shape index: {}]
  %s6 = inlined_call_operand.hbm [shape: bf16[544,512], index: 6, kind: input, shape index: {}]
  %s7 = inlined_call_operand.hbm [shape: f32[4,8,128], index: 7, kind: output, shape index: {}]
  %s8 = sld [smem:[#allocation0]]
  $region81: #{tpu_custom_call.1} parent=0
    _
  %s10 = ssub.s32 1, %s8
  %s11 = scalar_select 0, %s10, %s8
  %s13 = sshll.u32 %s0, 4
  %s14 = int_to_ptr.hbm [resolvable:$true] %s13
  %16 = dma.hbm_to_smem %s14, 16, [#allocation5], [#allocation4]
  %18 = dma.done [#allocation4], 16
  %19 = sfence
  $region1: #{tpu_custom_call.1} parent=0
    #allocation6 [shape = 'u8[65536]{0}', space=vmem, size = 0x10000, scoped, tag = 'input window, operand 1, single buffered']
    #allocation7 [shape = 's32[2]{0}', space=sflag, size = 0x8, scoped, tag = 'scoped memory for tpu_custom_call.1']
    #allocation8 [shape = 's32[2]{0}', space=sflag, size = 0x8, scoped, tag = 'scoped memory for tpu_custom_call.1']
    #allocation9 [shape = 'u8[1024]{0}', space=vmem, size = 0x400, scoped, tag = 'input window, operand 2, single buffered']
    #allocation10 [shape = 's32[1]{0}', space=sflag, size = 0x4, scoped, tag = 'scoped memory for tpu_custom_call.1']
    #allocation11 [shape = 'u8[65536]{0}', space=vmem, size = 0x10000, scoped, tag = 'input window, operand 4, single buffered']
    #allocation12 [shape = 'u8[241664]{0}', space=vmem, size = 0x3b000, scoped, tag = 'input window, operand 5, single buffered']
    #allocation13 [shape = 's32[1]{0}', space=sflag, size = 0x4, scoped, tag = 'scoped memory for tpu_custom_call.1']
    #allocation14 [shape = 'u8[557056]{0}', space=vmem, size = 0x88000, scoped, tag = 'input window, operand 6, single buffered']
    #allocation15 [shape = 'u8[8192]{0}', space=vmem, size = 0x2000, scoped, tag = 'output window, operand 0']
    %20 = vsyncpa [#allocation7], 0
    %21 = vsyncpa [#allocation10], 0
    %22 = vsyncpa [#allocation13], 0
    %23 = vsyncpa [#allocation8], 0
    %s24 = scalar_lea.sflag [#allocation8], 1
    %25 = vsyncpa %s24, 0
    loop: start=0, step=1, limit=6
    $region2: #{tpu_custom_call.1} parent=1 // loop_pre_header
      _
    $region3: #{tpu_custom_call.1} parent=1 // loop_header
      %s27 = sphi 0, %s31
      %p28 = scmp.ge.s32.totalorder %s27, 6
      %s35 = sphi 0, %s35
      %s37 = sphi 0, %s35
      %s38 = sphi 0, %s37
      %s52 = sphi 0, %s38
      %s56 = sphi 0, %s56
      %s58 = sphi 0, %s56
      %s59 = sphi 0, %s58
      %s73 = sphi 0, %s59
      %s77 = sphi 0, %s77
      %s79 = sphi 0, %s77
      %s80 = sphi 0, %s79
      %s94 = sphi 0, %s80
      %s98 = sphi 0, %s98
      %s100 = sphi 0, %s98
      %s101 = sphi 0, %s100
      %s115 = sphi 0, %s101
      %s119 = sphi 0, %s119
      %s121 = sphi 0, %s119
      %s122 = sphi 0, %s121
      %s136 = sphi 0, %s122
      %s140 = sphi 0, %s140
      %s142 = sphi 0, %s140
      %s143 = sphi 0, %s142
      %s157 = sphi 0, %s143
      %s163 = sphi 0, %s165
      %s166 = sphi 0, %s163
      %s167 = sphi 0, %s166
      %s183 = sphi 0, %s167
    $region4: #{tpu_custom_call.1} parent=1 // loop_header_branch
      %30 = sbr.rel (%p28) target = $region8
    $region5: #{tpu_custom_call.1} parent=1 // loop_body
      %s32 = ssub.s32 %s27, 1
      %s33 = ssub.s32 %s27, 2
      %s34 = sadd.s32 %s27, 1
      %s36 = sadd.s32 %s35, 1
      %p39 = scmp.eq.s32.totalorder %s27, 3
      %p40 = scmp.ne.s32.totalorder %s35, %s37
      %p41 = scmp.eq.s32.totalorder %s27, 0
      %p42 = por %p40, %p41
      %p43 = scmp.ne.s32.totalorder %s35, %s37
      %p44 = scmp.eq.s32.totalorder %s32, 3
      %p45 = por %p43, %p44
      %p46 = scmp.ne.s32.totalorder %s37, %s38
      %p47 = scmp.eq.s32.totalorder %s32, 0
      %p48 = por %p46, %p47
      %p49 = scmp.ne.s32.totalorder %s37, %s38
      %p50 = scmp.eq.s32.totalorder %s33, 3
      %p51 = por %p49, %p50
      %p53 = scmp.ne.s32.totalorder %s38, %s52
      %p54 = scmp.eq.s32.totalorder %s33, 0
      %p55 = por %p53, %p54
      %s57 = sadd.s32 %s56, 1
      %p60 = scmp.eq.s32.totalorder %s27, 3
      %p61 = scmp.ne.s32.totalorder %s56, %s58
      %p62 = scmp.eq.s32.totalorder %s27, 0
      %p63 = por %p61, %p62
      %p64 = scmp.ne.s32.totalorder %s56, %s58
      %p65 = scmp.eq.s32.totalorder %s32, 3
      %p66 = por %p64, %p65
      %p67 = scmp.ne.s32.totalorder %s58, %s59
      %p68 = scmp.eq.s32.totalorder %s32, 0
      %p69 = por %p67, %p68
      %p70 = scmp.ne.s32.totalorder %s58, %s59
      %p71 = scmp.eq.s32.totalorder %s33, 3
      %p72 = por %p70, %p71
      %p74 = scmp.ne.s32.totalorder %s59, %s73
      %p75 = scmp.eq.s32.totalorder %s33, 0
      %p76 = por %p74, %p75
      %s78 = sadd.s32 %s77, 1
      %p81 = scmp.eq.s32.totalorder %s27, 3
      %p82 = scmp.ne.s32.totalorder %s77, %s79
      %p83 = scmp.eq.s32.totalorder %s27, 0
      %p84 = por %p82, %p83
      %p85 = scmp.ne.s32.totalorder %s77, %s79
      %p86 = scmp.eq.s32.totalorder %s32, 3
      %p87 = por %p85, %p86
      %p88 = scmp.ne.s32.totalorder %s79, %s80
      %p89 = scmp.eq.s32.totalorder %s32, 0
      %p90 = por %p88, %p89
      %p91 = scmp.ne.s32.totalorder %s79, %s80
      %p92 = scmp.eq.s32.totalorder %s33, 3
      %p93 = por %p91, %p92
      %p95 = scmp.ne.s32.totalorder %s80, %s94
      %p96 = scmp.eq.s32.totalorder %s33, 0
      %p97 = por %p95, %p96
      %s99 = sadd.s32 %s98, 1
      %p102 = scmp.eq.s32.totalorder %s27, 3
      %p103 = scmp.ne.s32.totalorder %s98, %s100
      %p104 = scmp.eq.s32.totalorder %s27, 0
      %p105 = por %p103, %p104
      %p106 = scmp.ne.s32.totalorder %s98, %s100
      %p107 = scmp.eq.s32.totalorder %s32, 3
      %p108 = por %p106, %p107
      %p109 = scmp.ne.s32.totalorder %s100, %s101
      %p110 = scmp.eq.s32.totalorder %s32, 0
      %p111 = por %p109, %p110
      %p112 = scmp.ne.s32.totalorder %s100, %s101
      %p113 = scmp.eq.s32.totalorder %s33, 3
      %p114 = por %p112, %p113
      %p116 = scmp.ne.s32.totalorder %s101, %s115
      %p117 = scmp.eq.s32.totalorder %s33, 0
      %p118 = por %p116, %p117
      %s120 = sadd.s32 %s119, 1
      %p123 = scmp.eq.s32.totalorder %s27, 3
      %p124 = scmp.ne.s32.totalorder %s119, %s121
      %p125 = scmp.eq.s32.totalorder %s27, 0
      %p126 = por %p124, %p125
      %p127 = scmp.ne.s32.totalorder %s119, %s121
      %p128 = scmp.eq.s32.totalorder %s32, 3
      %p129 = por %p127, %p128
      %p130 = scmp.ne.s32.totalorder %s121, %s122
      %p131 = scmp.eq.s32.totalorder %s32, 0
      %p132 = por %p130, %p131
      %p133 = scmp.ne.s32.totalorder %s121, %s122
      %p134 = scmp.eq.s32.totalorder %s33, 3
      %p135 = por %p133, %p134
      %p137 = scmp.ne.s32.totalorder %s122, %s136
      %p138 = scmp.eq.s32.totalorder %s33, 0
      %p139 = por %p137, %p138
      %s141 = sadd.s32 %s140, 1
      %p144 = scmp.eq.s32.totalorder %s27, 3
      %p145 = scmp.ne.s32.totalorder %s140, %s142
      %p146 = scmp.eq.s32.totalorder %s27, 0
      %p147 = por %p145, %p146
      %p148 = scmp.ne.s32.totalorder %s140, %s142
      %p149 = scmp.eq.s32.totalorder %s32, 3
      %p150 = por %p148, %p149
      %p151 = scmp.ne.s32.totalorder %s142, %s143
      %p152 = scmp.eq.s32.totalorder %s32, 0
      %p153 = por %p151, %p152
      %p154 = scmp.ne.s32.totalorder %s142, %s143
      %p155 = scmp.eq.s32.totalorder %s33, 3
      %p156 = por %p154, %p155
      %p158 = scmp.ne.s32.totalorder %s143, %s157
      %p159 = scmp.eq.s32.totalorder %s33, 0
      %p160 = por %p158, %p159
      %s161 = ssub.s32 %s27, %s34
      %p162 = scmp.eq.s32.totalorder %s161, 0
      %s164 = sadd.s32 %s163, 1
      %s165 = scalar_select %p162, %s163, %s164
      %p168 = pneg %p162
      %p169 = scmp.eq.s32.totalorder %s27, 3
      %p170 = por %p168, %p169
      %p171 = scmp.ne.s32.totalorder %s163, %s166
      %p172 = scmp.eq.s32.totalorder %s27, 0
      %p173 = por %p171, %p172
      %p174 = scmp.ne.s32.totalorder %s163, %s166
      %p175 = scmp.eq.s32.totalorder %s32, 3
      %p176 = por %p174, %p175
      %p177 = scmp.ne.s32.totalorder %s166, %s167
      %p178 = scmp.eq.s32.totalorder %s32, 0
      %p179 = por %p177, %p178
      %p180 = scmp.ne.s32.totalorder %s166, %s167
      %p181 = scmp.eq.s32.totalorder %s33, 3
      %p182 = por %p180, %p181
      %p184 = scmp.ne.s32.totalorder %s167, %s183
      %p185 = scmp.eq.s32.totalorder %s33, 0
      %p186 = por %p184, %p185
      %p187 = scmp.le.s32.totalorder 1, %s27
      %p188 = scmp.lt.s32.totalorder %s27, 5
      %p189 = pnand %p187, %p188
      %p190 = pneg %p189
      // Predicated region
      $region9: #{tpu_custom_call.1} parent=5 // pred_check
        _
      $region10: #{tpu_custom_call.1} parent=5 // pred_check_branch
        %192 = sbr.rel (%p189) target = $region12
      $region11: #{tpu_custom_call.1} parent=5 // pred_region
        %s193 = ssub.s32 %s27, 1
        // Predicated region
        $region13: #{tpu_custom_call.1} parent=11 // pred_check
          %p194 = pneg %p48
        $region14: #{tpu_custom_call.1} parent=11 // pred_check_branch
          %196 = sbr.rel (%p194) target = $region16
        $region15: #{tpu_custom_call.1} parent=11 // pred_region
          %198 = vsyncadd [#allocation7], 0
          %s199 = sshll.u32 %s1, 4
          %s200 = int_to_ptr.hbm [resolvable:$true] %s199
          %s201 = sshll.u32 [#allocation6], 4
          %s202 = int_to_ptr.vmem [resolvable:$true] %s201
          %207 = dma.hbm_to_vmem [thread:$0]  %s200, 2048, %s202, [#allocation7], 128, 128, 8
        $region16: #{tpu_custom_call.1} parent=11 // pred_fallthru
          _
        // Predicated region
        $region17: #{tpu_custom_call.1} parent=11 // pred_check
          %p208 = pneg %p69
        $region18: #{tpu_custom_call.1} parent=11 // pred_check_branch
          %210 = sbr.rel (%p208) target = $region20
        $region19: #{tpu_custom_call.1} parent=11 // pred_region
          %212 = vsyncadd [#allocation10], 0
          %s214 = sshll.u32 %s2, 4
          %s215 = int_to_ptr.hbm [resolvable:$true] %s214
          %s216 = sshll.u32 [#allocation9], 4
          %s217 = int_to_ptr.vmem [resolvable:$true] %s216
          %219 = dma.hbm_to_vmem [thread:$0]  %s215, 32, %s217, [#allocation10]
        $region20: #{tpu_custom_call.1} parent=11 // pred_fallthru
          _
        // Predicated region
        $region21: #{tpu_custom_call.1} parent=11 // pred_check
          %p220 = pneg %p90
        $region22: #{tpu_custom_call.1} parent=11 // pred_check_branch
          %222 = sbr.rel (%p220) target = $region24
        $region23: #{tpu_custom_call.1} parent=11 // pred_region
          _
        $region24: #{tpu_custom_call.1} parent=11 // pred_fallthru
          _
        // Predicated region
        $region25: #{tpu_custom_call.1} parent=11 // pred_check
          %p223 = pneg %p111
        $region26: #{tpu_custom_call.1} parent=11 // pred_check_branch
          %225 = sbr.rel (%p223) target = $region28
        $region27: #{tpu_custom_call.1} parent=11 // pred_region
          %227 = vsyncadd [#allocation10], 0
          %s228 = sshll.u32 %s4, 4
          %s229 = int_to_ptr.hbm [resolvable:$true] %s228
          %s230 = sshll.u32 [#allocation11], 4
          %s231 = int_to_ptr.vmem [resolvable:$true] %s230
          %236 = dma.hbm_to_vmem [thread:$0]  %s229, 2048, %s231, [#allocation10], 128, 128, 8
        $region28: #{tpu_custom_call.1} parent=11 // pred_fallthru
          _
        // Predicated region
        $region29: #{tpu_custom_call.1} parent=11 // pred_check
          %p237 = pneg %p132
        $region30: #{tpu_custom_call.1} parent=11 // pred_check_branch
          %239 = sbr.rel (%p237) target = $region32
        $region31: #{tpu_custom_call.1} parent=11 // pred_region
          %241 = vsyncadd [#allocation13], 0
          %s242 = sshll.u32 %s5, 4
          %s243 = int_to_ptr.hbm [resolvable:$true] %s242
          %s244 = sshll.u32 [#allocation12], 4
          %s245 = int_to_ptr.vmem [resolvable:$true] %s244
          %250 = dma.hbm_to_vmem [thread:$0]  %s243, 7552, %s245, [#allocation13], 64, 64, 4
        $region32: #{tpu_custom_call.1} parent=11 // pred_fallthru
          _
        // Predicated region
        $region33: #{tpu_custom_call.1} parent=11 // pred_check
          %p251 = pneg %p153
        $region34: #{tpu_custom_call.1} parent=11 // pred_check_branch
          %253 = sbr.rel (%p251) target = $region36
        $region35: #{tpu_custom_call.1} parent=11 // pred_region
          %255 = vsyncadd [#allocation13], 0
          %s256 = sshll.u32 %s6, 4
          %s257 = int_to_ptr.hbm [resolvable:$true] %s256
          %s258 = sshll.u32 [#allocation14], 4
          %s259 = int_to_ptr.vmem [resolvable:$true] %s258
          %264 = dma.hbm_to_vmem [thread:$0]  %s257, 17408, %s259, [#allocation13], 256, 256, 16
        $region36: #{tpu_custom_call.1} parent=11 // pred_fallthru
          _
      $region12: #{tpu_custom_call.1} parent=5 // pred_fallthru
        _
      %p265 = scmp.lt.s32.totalorder %s27, 4
      // Predicated region
      $region37: #{tpu_custom_call.1} parent=5 // pred_check
        %p266 = pneg %p265
      $region38: #{tpu_custom_call.1} parent=5 // pred_check_branch
        %268 = sbr.rel (%p266) target = $region40
      $region39: #{tpu_custom_call.1} parent=5 // pred_region
        _
      $region40: #{tpu_custom_call.1} parent=5 // pred_fallthru
        _
      %p269 = scmp.le.s32.totalorder 1, %s27
      %p270 = scmp.lt.s32.totalorder %s27, 5
      %p271 = pnand %p269, %p270
      %p272 = pneg %p271
      // Predicated region
      $region41: #{tpu_custom_call.1} parent=5 // pred_check
        _
      $region42: #{tpu_custom_call.1} parent=5 // pred_check_branch
        %274 = sbr.rel (%p271) target = $region44
      $region43: #{tpu_custom_call.1} parent=5 // pred_region
        %s275 = ssub.s32 %s27, 1
        // Predicated region
        $region45: #{tpu_custom_call.1} parent=43 // pred_check
          %p276 = pneg %p48
        $region46: #{tpu_custom_call.1} parent=43 // pred_check_branch
          %278 = sbr.rel (%p276) target = $region48
        $region47: #{tpu_custom_call.1} parent=43 // pred_region
          %280 = dma.done [#allocation7], 2048
        $region48: #{tpu_custom_call.1} parent=43 // pred_fallthru
          _
        // Predicated region
        $region49: #{tpu_custom_call.1} parent=43 // pred_check
          %p281 = pneg %p69
        $region50: #{tpu_custom_call.1} parent=43 // pred_check_branch
          %283 = sbr.rel (%p281) target = $region52
        $region51: #{tpu_custom_call.1} parent=43 // pred_region
          %285 = dma.done [#allocation10], 32
        $region52: #{tpu_custom_call.1} parent=43 // pred_fallthru
          _
        // Predicated region
        $region53: #{tpu_custom_call.1} parent=43 // pred_check
          %p286 = pneg %p111
        $region54: #{tpu_custom_call.1} parent=43 // pred_check_branch
          %288 = sbr.rel (%p286) target = $region56
        $region55: #{tpu_custom_call.1} parent=43 // pred_region
          %290 = dma.done [#allocation10], 2048
        $region56: #{tpu_custom_call.1} parent=43 // pred_fallthru
          _
        // Predicated region
        $region57: #{tpu_custom_call.1} parent=43 // pred_check
          %p291 = pneg %p132
        $region58: #{tpu_custom_call.1} parent=43 // pred_check_branch
          %293 = sbr.rel (%p291) target = $region60
        $region59: #{tpu_custom_call.1} parent=43 // pred_region
          %295 = dma.done [#allocation13], 7552
        $region60: #{tpu_custom_call.1} parent=43 // pred_fallthru
          _
        // Predicated region
        $region61: #{tpu_custom_call.1} parent=43 // pred_check
          %p296 = pneg %p153
        $region62: #{tpu_custom_call.1} parent=43 // pred_check_branch
          %298 = sbr.rel (%p296) target = $region64
        $region63: #{tpu_custom_call.1} parent=43 // pred_region
          %300 = dma.done [#allocation13], 17408
        $region64: #{tpu_custom_call.1} parent=43 // pred_fallthru
          _
        %p301 = pneg %p48
        %p302 = pneg %p45
        %p303 = pneg %p69
        %p304 = pneg %p66
        %p305 = pneg %p90
        %p306 = pneg %p87
        %p307 = pneg %p111
        %p308 = pneg %p108
        %p309 = pneg %p132
        %p310 = pneg %p129
        %p311 = pneg %p153
        %p312 = pneg %p150
        %p313 = pneg %p179
        %p314 = pneg %p176
        %s315 = sand.u32 %s166, 1
        %s316 = scalar_lea.sflag [#allocation8], %s315
        %s317 = sand.u32 %s166, 1
        %s318 = smul.addr %s317, 8
        %s319 = scalar_lea.vmem [#allocation15], %s318
        %p320 = scmp.eq.s32.totalorder %s32, 0
        // Predicated region
        $region65: #{tpu_custom_call.1} parent=43 // pred_check
          %p321 = pneg %p320
        $region66: #{tpu_custom_call.1} parent=43 // pred_check_branch
          %323 = sbr.rel (%p321) target = $region68
        $region67: #{tpu_custom_call.1} parent=43 // pred_region
          %v324 = vld [vmem:[#allocation9] sm:$0x3]
          %325 = vst [vmem:[#allocation2] sm:$0x3] %v324
          %v326 = vld [vmem:[%s3] sm:$0x3]
          %327 = vst [vmem:[#allocation3] sm:$0x3] %v326
        $region68: #{tpu_custom_call.1} parent=43 // pred_fallthru
          _
        %s328 = sld [smem:[#allocation5 + %s32]]
        %s329 = scalar_lea.vmem [#allocation6], %s328
        %v330 = vld [vmem:[%s329] sm:$0x1]
        %v331 = vld [vmem:[#allocation2] sm:$0x1]
        %v332 = vld [vmem:[#allocation2 + $0x1] sm:$0x1]
        %v333 = vld [vmem:[#allocation3] sm:$0x1]
        %v334 = vld [vmem:[#allocation3 + $0x1] sm:$0x1]
        %v335 = vld [vmem:[#allocation12] sm:$0xf]
        %v336 = vld [vmem:[#allocation12 + $0x4] sm:$0xf]
        %v337 = vld [vmem:[#allocation12 + $0x8] sm:$0xf]
        %v338 = vld [vmem:[#allocation12 + $0xc] sm:$0xf]
        %v339 = vld [vmem:[#allocation12 + $0x10] sm:$0xf]
        %v340 = vld [vmem:[#allocation12 + $0x14] sm:$0xf]
        %v341 = vld [vmem:[#allocation12 + $0x18] sm:$0xf]
        %v342 = vld [vmem:[#allocation12 + $0x1c] sm:$0xf]
        %v343 = vld [vmem:[#allocation12 + $0x20] sm:$0xf]
        %v344 = vld [vmem:[#allocation12 + $0x24] sm:$0xf]
        %v345 = vld [vmem:[#allocation12 + $0x28] sm:$0xf]
        %v346 = vld [vmem:[#allocation12 + $0x2c] sm:$0xf]
        %v347 = vld [vmem:[#allocation12 + $0x30] sm:$0xf]
        %v348 = vld [vmem:[#allocation12 + $0x34] sm:$0xf]
        %v349 = vld [vmem:[#allocation12 + $0x38] sm:$0xf]
        %v350 = vld [vmem:[#allocation12 + $0x3c] sm:$0xf]
        %v351 = vpack.c.bf16 %v330, %v330
        %v352 = vld [vmem:[#allocation12 + $0x40] sm:$0xf]
        %v353 = vld [vmem:[#allocation12 + $0x44] sm:$0xf]
        %v354 = vld [vmem:[#allocation12 + $0x48] sm:$0xf]
        %v355 = vld [vmem:[#allocation12 + $0x4c] sm:$0xf]
        %v356 = vld [vmem:[#allocation12 + $0x50] sm:$0xf]
        %v357 = vld [vmem:[#allocation12 + $0x54] sm:$0xf]
        %v358 = vld [vmem:[#allocation12 + $0x58] sm:$0xf]
        %v359 = vld [vmem:[#allocation12 + $0x5c] sm:$0xf]
        %v360 = vld [vmem:[#allocation12 + $0x60] sm:$0xf]
        %v361 = vld [vmem:[#allocation12 + $0x64] sm:$0xf]
        %v362 = vld [vmem:[#allocation12 + $0x68] sm:$0xf]
        %v363 = vld [vmem:[#allocation12 + $0x6c] sm:$0xf]
        %v364 = vld [vmem:[#allocation12 + $0x70] sm:$0xf]
        %v365 = vld [vmem:[#allocation12 + $0x74] sm:$0xf]
        %v366 = vld [vmem:[#allocation12 + $0x78] sm:$0xf]
        %v367 = vld [vmem:[#allocation12 + $0x7c] sm:$0xf]
        %v368 = vpack.c.bf16 %v331, %v331
        %v385 = vunpack.c.l.b16 %v352
        %v386 = vunpack.c.l.b16 %v353
        %v387 = vunpack.c.l.b16 %v354
        %v388 = vunpack.c.l.b16 %v355
        %v389 = vunpack.c.l.b16 %v356
        %v390 = vunpack.c.l.b16 %v357
        %v391 = vunpack.c.l.b16 %v358
        %v392 = vunpack.c.l.b16 %v359
        %v393 = vunpack.c.l.b16 %v360
        %v394 = vunpack.c.l.b16 %v361
        %v395 = vunpack.c.l.b16 %v362
        %v396 = vunpack.c.l.b16 %v363
        %v397 = vunpack.c.l.b16 %v364
        %v398 = vunpack.c.l.b16 %v365
        %v399 = vunpack.c.l.b16 %v366
        %v400 = vunpack.c.l.b16 %v367
        %v401 = vpack.c.b16 %v386, %v385
        %v402 = vpack.c.b16 %v388, %v387
        %v403 = vpack.c.b16 %v390, %v389
        %v404 = vpack.c.b16 %v392, %v391
        %v405 = vpack.c.b16 %v394, %v393
        %v406 = vpack.c.b16 %v396, %v395
        %v407 = vpack.c.b16 %v398, %v397
        %v408 = vpack.c.b16 %v400, %v399
        %417 = vmatpush.bf16.msra.mxu0 %v408
        %418 = vmatpush.bf16.msra.mxu0 %v407
        %419 = vmatpush.bf16.msra.mxu0 %v406
        %420 = vmatpush.bf16.msra.mxu0 %v405
        %421 = vmatpush.bf16.msra.mxu0 %v404
        %422 = vmatpush.bf16.msra.mxu0 %v403
        %423 = vmatpush.bf16.msra.mxu0 %v402
        %424 = vmatpush.bf16.msra.mxu0 %v401
        %425 = vmatmul.bf16.gmra.mxu0 %v368
        %v426 = vpop.f32.mrf.mxu0
        %v427 = vadd.f32 0.0, %v426
        %v428 = vpop.f32.mrf.mxu0
        %429 = vdwg.mxu0
        %v446 = vunpack.c.l.b16 %v335
        %v447 = vunpack.c.l.b16 %v336
        %v448 = vunpack.c.l.b16 %v337
        %v449 = vunpack.c.l.b16 %v338
        %v450 = vunpack.c.l.b16 %v339
        %v451 = vunpack.c.l.b16 %v340
        %v452 = vunpack.c.l.b16 %v341
        %v453 = vunpack.c.l.b16 %v342
        %v454 = vunpack.c.l.b16 %v343
        %v455 = vunpack.c.l.b16 %v344
        %v456 = vunpack.c.l.b16 %v345
        %v457 = vunpack.c.l.b16 %v346
        %v458 = vunpack.c.l.b16 %v347
        %v459 = vunpack.c.l.b16 %v348
        %v460 = vunpack.c.l.b16 %v349
        %v461 = vunpack.c.l.b16 %v350
        %v462 = vpack.c.b16 %v447, %v446
        %v463 = vpack.c.b16 %v449, %v448
        %v464 = vpack.c.b16 %v451, %v450
        %v465 = vpack.c.b16 %v453, %v452
        %v466 = vpack.c.b16 %v455, %v454
        %v467 = vpack.c.b16 %v457, %v456
        %v468 = vpack.c.b16 %v459, %v458
        %v469 = vpack.c.b16 %v461, %v460
        %478 = vmatpush.bf16.msra.mxu0 %v469
        %479 = vmatpush.bf16.msra.mxu0 %v468
        %480 = vmatpush.bf16.msra.mxu0 %v467
        %481 = vmatpush.bf16.msra.mxu0 %v466
        %482 = vmatpush.bf16.msra.mxu0 %v465
        %483 = vmatpush.bf16.msra.mxu0 %v464
        %484 = vmatpush.bf16.msra.mxu0 %v463
        %485 = vmatpush.bf16.msra.mxu0 %v462
        %486 = vmatmul.bf16.gmra.mxu0 %v351
        %v487 = vpop.f32.mrf.mxu0
        %v488 = vadd.f32 %v427, %v487
        %v489 = vpop.f32.mrf.mxu0
        %490 = vdwg.mxu0
        %v491 = vld [vmem:[#allocation12 + $0x80] sm:$0xf]
        %v492 = vld [vmem:[#allocation12 + $0x84] sm:$0xf]
        %v493 = vld [vmem:[#allocation12 + $0x88] sm:$0xf]
        %v494 = vld [vmem:[#allocation12 + $0x8c] sm:$0xf]
        %v495 = vld [vmem:[#allocation12 + $0x90] sm:$0xf]
        %v496 = vld [vmem:[#allocation12 + $0x94] sm:$0xf]
        %v497 = vld [vmem:[#allocation12 + $0x98] sm:$0xf]
        %v498 = vld [vmem:[#allocation12 + $0x9c] sm:$0xf]
        %v499 = vld [vmem:[#allocation12 + $0xa0] sm:$0xf]
        %v500 = vld [vmem:[#allocation12 + $0xa4] sm:$0xf]
        %v501 = vld [vmem:[#allocation12 + $0xa8] sm:$0xf]
        %v502 = vld [vmem:[#allocation12 + $0xac] sm:$0xf]
        %v503 = vld [vmem:[#allocation12 + $0xb0] sm:$0xf]
        %v504 = vld [vmem:[#allocation12 + $0xb4] sm:$0xf]
        %v505 = vld [vmem:[#allocation12 + $0xb8] sm:$0xf]
        %v506 = vld [vmem:[#allocation12 + $0xbc] sm:$0xf]
        %v507 = vpack.c.bf16 %v332, %v332
        %v524 = vunpack.c.l.b16 %v491
        %v525 = vunpack.c.l.b16 %v492
        %v526 = vunpack.c.l.b16 %v493
        %v527 = vunpack.c.l.b16 %v494
        %v528 = vunpack.c.l.b16 %v495
        %v529 = vunpack.c.l.b16 %v496
        %v530 = vunpack.c.l.b16 %v497
        %v531 = vunpack.c.l.b16 %v498
        %v532 = vunpack.c.l.b16 %v499
        %v533 = vunpack.c.l.b16 %v500
        %v534 = vunpack.c.l.b16 %v501
        %v535 = vunpack.c.l.b16 %v502
        %v536 = vunpack.c.l.b16 %v503
        %v537 = vunpack.c.l.b16 %v504
        %v538 = vunpack.c.l.b16 %v505
        %v539 = vunpack.c.l.b16 %v506
        %v540 = vpack.c.b16 %v525, %v524
        %v541 = vpack.c.b16 %v527, %v526
        %v542 = vpack.c.b16 %v529, %v528
        %v543 = vpack.c.b16 %v531, %v530
        %v544 = vpack.c.b16 %v533, %v532
        %v545 = vpack.c.b16 %v535, %v534
        %v546 = vpack.c.b16 %v537, %v536
        %v547 = vpack.c.b16 %v539, %v538
        %556 = vmatpush.bf16.msra.mxu0 %v547
        %557 = vmatpush.bf16.msra.mxu0 %v546
        %558 = vmatpush.bf16.msra.mxu0 %v545
        %559 = vmatpush.bf16.msra.mxu0 %v544
        %560 = vmatpush.bf16.msra.mxu0 %v543
        %561 = vmatpush.bf16.msra.mxu0 %v542
        %562 = vmatpush.bf16.msra.mxu0 %v541
        %563 = vmatpush.bf16.msra.mxu0 %v540
        %564 = vmatmul.bf16.gmra.mxu0 %v507
        %v565 = vpop.f32.mrf.mxu0
        %v566 = vadd.f32 0.0, %v565
        %v567 = vpop.f32.mrf.mxu0
        %568 = vdwg.mxu0
        %v569 = vadd.f32 %v488, %v566
        %v570 = vld [vmem:[#allocation12 + $0xc0] sm:$0x1]
        %v571 = vunpack.c.l.bf16 %v570
        %v572 = vadd.f32 %v569, %v571
        %vm573 = vcmask 1040384
        %v574 = vsel %vm573, %v572, -inf
        %575 = vmax.xlane.f32.xlu0 %v574
        %v576 = vpop.xlane.xlu0 %575
        %v577 = vsub.f32 %v572, %v576
        %v578 = vmul.f32 %v577, 1.442695
        %v579 = vpow.pop %v578
        %v580 = vsel %vm573, %v579, 0.0
        %581 = vadd.xlane.f32.xlu0 %v580
        %v582 = vpop.xlane.xlu0 %581
        %v583 = vrcp.pop %v582
        %v584 = vmul.f32 %v582, %v583
        %v585 = vsub.f32 1.0, %v584
        %v586 = vmul.f32 %v583, %v585
        %v587 = vadd.f32 %v583, %v586
        %vm588 = vweird.f32 %v582
        %vm589 = vweird.f32 %v583
        %vm590 = vmor %vm588, %vm589
        %v591 = vsel %vm590, %v583, %v587
        %v592 = vand.u32 2147483647, %v582
        %vm593 = vcmp.eq.f32.partialorder %v592, 8.507059e+37
        %v594 = vand.u32 %v582, 2147483648
        %v595 = vor.u32 1.1754944e-38, %v594
        %v596 = vsel %vm593, %v595, %v591
        %v597 = vmul.f32 %v579, %v596
        %v598 = vld [vmem:[#allocation11] sm:$0xff]
        %v599 = vld [vmem:[#allocation11 + $0x8] sm:$0xff]
        %v600 = vld [vmem:[#allocation11 + $0x10] sm:$0xff]
        %v601 = vld [vmem:[#allocation11 + $0x18] sm:$0xff]
        %v602 = vld [vmem:[#allocation11 + $0x20] sm:$0xff]
        %v603 = vld [vmem:[#allocation11 + $0x28] sm:$0xff]
        %v604 = vld [vmem:[#allocation11 + $0x30] sm:$0xff]
        %v605 = vld [vmem:[#allocation11 + $0x38] sm:$0xff]
        %v606 = vld [vmem:[#allocation11 + $0x40] sm:$0xff]
        %v607 = vld [vmem:[#allocation11 + $0x48] sm:$0xff]
        %v608 = vld [vmem:[#allocation11 + $0x50] sm:$0xff]
        %v609 = vld [vmem:[#allocation11 + $0x58] sm:$0xff]
        %v610 = vld [vmem:[#allocation11 + $0x60] sm:$0xff]
        %v611 = vld [vmem:[#allocation11 + $0x68] sm:$0xff]
        %v612 = vld [vmem:[#allocation11 + $0x70] sm:$0xff]
        %v613 = vld [vmem:[#allocation11 + $0x78] sm:$0xff]
        %v614 = vpack.c.bf16 %v597, %v597
        %v631 = vunpack.c.l.b16 %v598
        %v632 = vunpack.c.h.b16 %v598
        %v633 = vunpack.c.l.b16 %v599
        %v634 = vunpack.c.h.b16 %v599
        %v635 = vunpack.c.l.b16 %v600
        %v636 = vunpack.c.h.b16 %v600
        %v637 = vunpack.c.l.b16 %v601
        %v638 = vunpack.c.h.b16 %v601
        %v639 = vunpack.c.l.b16 %v602
        %v640 = vunpack.c.h.b16 %v602
        %v641 = vunpack.c.l.b16 %v603
        %v642 = vunpack.c.h.b16 %v603
        %v643 = vunpack.c.l.b16 %v604
        %v644 = vunpack.c.h.b16 %v604
        %v645 = vunpack.c.l.b16 %v605
        %v646 = vunpack.c.h.b16 %v605
        %v647 = vunpack.c.l.b16 %v606
        %v648 = vunpack.c.h.b16 %v606
        %v649 = vunpack.c.l.b16 %v607
        %v650 = vunpack.c.h.b16 %v607
        %v651 = vunpack.c.l.b16 %v608
        %v652 = vunpack.c.h.b16 %v608
        %v653 = vunpack.c.l.b16 %v609
        %v654 = vunpack.c.h.b16 %v609
        %v655 = vunpack.c.l.b16 %v610
        %v656 = vunpack.c.h.b16 %v610
        %v657 = vunpack.c.l.b16 %v611
        %v658 = vunpack.c.h.b16 %v611
        %v659 = vunpack.c.l.b16 %v612
        %v660 = vunpack.c.h.b16 %v612
        %v661 = vunpack.c.l.b16 %v613
        %v662 = vunpack.c.h.b16 %v613
        %v663 = vpack.c.b16 %v633, %v631
        %v664 = vpack.c.b16 %v634, %v632
        %v665 = vpack.c.b16 %v637, %v635
        %v666 = vpack.c.b16 %v638, %v636
        %v667 = vpack.c.b16 %v641, %v639
        %v668 = vpack.c.b16 %v642, %v640
        %v669 = vpack.c.b16 %v645, %v643
        %v670 = vpack.c.b16 %v646, %v644
        %v671 = vpack.c.b16 %v649, %v647
        %v672 = vpack.c.b16 %v650, %v648
        %v673 = vpack.c.b16 %v653, %v651
        %v674 = vpack.c.b16 %v654, %v652
        %v675 = vpack.c.b16 %v657, %v655
        %v676 = vpack.c.b16 %v658, %v656
        %v677 = vpack.c.b16 %v661, %v659
        %v678 = vpack.c.b16 %v662, %v660
        %695 = vmatpush.bf16.msra.mxu0 %v677
        %696 = vmatpush.bf16.msra.mxu0 %v675
        %697 = vmatpush.bf16.msra.mxu0 %v673
        %698 = vmatpush.bf16.msra.mxu0 %v671
        %699 = vmatpush.bf16.msra.mxu0 %v669
        %700 = vmatpush.bf16.msra.mxu0 %v667
        %701 = vmatpush.bf16.msra.mxu0 %v665
        %702 = vmatpush.bf16.msra.mxu0 %v663
        %703 = vmatmul.bf16.gmra.mxu0 %v614
        %v704 = vpop.f32.mrf.mxu0
        %v705 = vadd.f32 0.0, %v704
        %v706 = vpop.f32.mrf.mxu0
        %707 = vdwg.mxu0
        %708 = vmatpush.bf16.msra.mxu0 %v678
        %709 = vmatpush.bf16.msra.mxu0 %v676
        %710 = vmatpush.bf16.msra.mxu0 %v674
        %711 = vmatpush.bf16.msra.mxu0 %v672
        %712 = vmatpush.bf16.msra.mxu0 %v670
        %713 = vmatpush.bf16.msra.mxu0 %v668
        %714 = vmatpush.bf16.msra.mxu0 %v666
        %715 = vmatpush.bf16.msra.mxu0 %v664
        %716 = vmatmul.bf16.gmra.mxu0 %v614
        %v717 = vpop.f32.mrf.mxu0
        %v718 = vadd.f32 0.0, %v717
        %v719 = vpop.f32.mrf.mxu0
        %720 = vdwg.mxu0
        %v721 = vld [vmem:[#allocation12 + $0xc8] sm:$0xf]
        %v722 = vld [vmem:[#allocation12 + $0xcc] sm:$0xf]
        %v723 = vld [vmem:[#allocation12 + $0xd0] sm:$0xf]
        %v724 = vld [vmem:[#allocation12 + $0xd4] sm:$0xf]
        %v725 = vld [vmem:[#allocation12 + $0xd8] sm:$0xf]
        %v726 = vld [vmem:[#allocation12 + $0xdc] sm:$0xf]
        %v727 = vld [vmem:[#allocation12 + $0xe0] sm:$0xf]
        %v728 = vld [vmem:[#allocation12 + $0xe4] sm:$0xf]
        %v729 = vld [vmem:[#allocation12 + $0xe8] sm:$0xf]
        %v730 = vld [vmem:[#allocation12 + $0xec] sm:$0xf]
        %v731 = vld [vmem:[#allocation12 + $0xf0] sm:$0xf]
        %v732 = vld [vmem:[#allocation12 + $0xf4] sm:$0xf]
        %v733 = vld [vmem:[#allocation12 + $0xf8] sm:$0xf]
        %v734 = vld [vmem:[#allocation12 + $0xfc] sm:$0xf]
        %v735 = vld [vmem:[#allocation12 + $0x100] sm:$0xf]
        %v736 = vld [vmem:[#allocation12 + $0x104] sm:$0xf]
        %v737 = vld [vmem:[#allocation12 + $0x108] sm:$0xf]
        %v738 = vld [vmem:[#allocation12 + $0x10c] sm:$0xf]
        %v739 = vld [vmem:[#allocation12 + $0x110] sm:$0xf]
        %v740 = vld [vmem:[#allocation12 + $0x114] sm:$0xf]
        %v741 = vld [vmem:[#allocation12 + $0x118] sm:$0xf]
        %v742 = vld [vmem:[#allocation12 + $0x11c] sm:$0xf]
        %v743 = vld [vmem:[#allocation12 + $0x120] sm:$0xf]
        %v744 = vld [vmem:[#allocation12 + $0x124] sm:$0xf]
        %v745 = vld [vmem:[#allocation12 + $0x128] sm:$0xf]
        %v746 = vld [vmem:[#allocation12 + $0x12c] sm:$0xf]
        %v747 = vld [vmem:[#allocation12 + $0x130] sm:$0xf]
        %v748 = vld [vmem:[#allocation12 + $0x134] sm:$0xf]
        %v749 = vld [vmem:[#allocation12 + $0x138] sm:$0xf]
        %v750 = vld [vmem:[#allocation12 + $0x13c] sm:$0xf]
        %v751 = vld [vmem:[#allocation12 + $0x140] sm:$0xf]
        %v752 = vld [vmem:[#allocation12 + $0x144] sm:$0xf]
        %v753 = vld [vmem:[#allocation12 + $0x148] sm:$0xf]
        %v754 = vld [vmem:[#allocation12 + $0x14c] sm:$0xf]
        %v755 = vld [vmem:[#allocation12 + $0x150] sm:$0xf]
        %v756 = vld [vmem:[#allocation12 + $0x154] sm:$0xf]
        %v757 = vld [vmem:[#allocation12 + $0x158] sm:$0xf]
        %v758 = vld [vmem:[#allocation12 + $0x15c] sm:$0xf]
        %v759 = vld [vmem:[#allocation12 + $0x160] sm:$0xf]
        %v760 = vld [vmem:[#allocation12 + $0x164] sm:$0xf]
        %v761 = vld [vmem:[#allocation12 + $0x168] sm:$0xf]
        %v762 = vld [vmem:[#allocation12 + $0x16c] sm:$0xf]
        %v763 = vld [vmem:[#allocation12 + $0x170] sm:$0xf]
        %v764 = vld [vmem:[#allocation12 + $0x174] sm:$0xf]
        %v765 = vld [vmem:[#allocation12 + $0x178] sm:$0xf]
        %v766 = vld [vmem:[#allocation12 + $0x17c] sm:$0xf]
        %v767 = vld [vmem:[#allocation12 + $0x180] sm:$0xf]
        %v768 = vld [vmem:[#allocation12 + $0x184] sm:$0xf]
        %v769 = vpack.c.bf16 %v705, %v705
        %v770 = vpack.c.bf16 %v718, %v718
        %v803 = vunpack.c.l.b16 %v737
        %v804 = vunpack.c.l.b16 %v738
        %v805 = vunpack.c.l.b16 %v739
        %v806 = vunpack.c.l.b16 %v740
        %v807 = vunpack.c.l.b16 %v741
        %v808 = vunpack.c.l.b16 %v742
        %v809 = vunpack.c.l.b16 %v743
        %v810 = vunpack.c.l.b16 %v744
        %v811 = vunpack.c.l.b16 %v745
        %v812 = vunpack.c.l.b16 %v746
        %v813 = vunpack.c.l.b16 %v747
        %v814 = vunpack.c.l.b16 %v748
        %v815 = vunpack.c.l.b16 %v749
        %v816 = vunpack.c.l.b16 %v750
        %v817 = vunpack.c.l.b16 %v751
        %v818 = vunpack.c.l.b16 %v752
        %v819 = vunpack.c.l.b16 %v753
        %v820 = vunpack.c.l.b16 %v754
        %v821 = vunpack.c.l.b16 %v755
        %v822 = vunpack.c.l.b16 %v756
        %v823 = vunpack.c.l.b16 %v757
        %v824 = vunpack.c.l.b16 %v758
        %v825 = vunpack.c.l.b16 %v759
        %v826 = vunpack.c.l.b16 %v760
        %v827 = vunpack.c.l.b16 %v761
        %v828 = vunpack.c.l.b16 %v762
        %v829 = vunpack.c.l.b16 %v763
        %v830 = vunpack.c.l.b16 %v764
        %v831 = vunpack.c.l.b16 %v765
        %v832 = vunpack.c.l.b16 %v766
        %v833 = vunpack.c.l.b16 %v767
        %v834 = vunpack.c.l.b16 %v768
        %v835 = vpack.c.b16 %v804, %v803
        %v836 = vpack.c.b16 %v806, %v805
        %v837 = vpack.c.b16 %v808, %v807
        %v838 = vpack.c.b16 %v810, %v809
        %v839 = vpack.c.b16 %v812, %v811
        %v840 = vpack.c.b16 %v814, %v813
        %v841 = vpack.c.b16 %v816, %v815
        %v842 = vpack.c.b16 %v818, %v817
        %v843 = vpack.c.b16 %v820, %v819
        %v844 = vpack.c.b16 %v822, %v821
        %v845 = vpack.c.b16 %v824, %v823
        %v846 = vpack.c.b16 %v826, %v825
        %v847 = vpack.c.b16 %v828, %v827
        %v848 = vpack.c.b16 %v830, %v829
        %v849 = vpack.c.b16 %v832, %v831
        %v850 = vpack.c.b16 %v834, %v833
        %867 = vmatpush.bf16.msra.mxu0 %v842
        %868 = vmatpush.bf16.msra.mxu0 %v841
        %869 = vmatpush.bf16.msra.mxu0 %v840
        %870 = vmatpush.bf16.msra.mxu0 %v839
        %871 = vmatpush.bf16.msra.mxu0 %v838
        %872 = vmatpush.bf16.msra.mxu0 %v837
        %873 = vmatpush.bf16.msra.mxu0 %v836
        %874 = vmatpush.bf16.msra.mxu0 %v835
        %875 = vmatmul.bf16.gmra.mxu0 %v769
        %v876 = vpop.f32.mrf.mxu0
        %v877 = vadd.f32 0.0, %v876
        %v878 = vpop.f32.mrf.mxu0
        %879 = vdwg.mxu0
        %880 = vmatpush.bf16.msra.mxu0 %v850
        %881 = vmatpush.bf16.msra.mxu0 %v849
        %882 = vmatpush.bf16.msra.mxu0 %v848
        %883 = vmatpush.bf16.msra.mxu0 %v847
        %884 = vmatpush.bf16.msra.mxu0 %v846
        %885 = vmatpush.bf16.msra.mxu0 %v845
        %886 = vmatpush.bf16.msra.mxu0 %v844
        %887 = vmatpush.bf16.msra.mxu0 %v843
        %888 = vmatmul.bf16.gmra.mxu0 %v770
        %v889 = vpop.f32.mrf.mxu0
        %v890 = vadd.f32 %v877, %v889
        %v891 = vpop.f32.mrf.mxu0
        %892 = vdwg.mxu0
        %v909 = vunpack.c.l.b16 %v721
        %v910 = vunpack.c.l.b16 %v722
        %v911 = vunpack.c.l.b16 %v723
        %v912 = vunpack.c.l.b16 %v724
        %v913 = vunpack.c.l.b16 %v725
        %v914 = vunpack.c.l.b16 %v726
        %v915 = vunpack.c.l.b16 %v727
        %v916 = vunpack.c.l.b16 %v728
        %v917 = vunpack.c.l.b16 %v729
        %v918 = vunpack.c.l.b16 %v730
        %v919 = vunpack.c.l.b16 %v731
        %v920 = vunpack.c.l.b16 %v732
        %v921 = vunpack.c.l.b16 %v733
        %v922 = vunpack.c.l.b16 %v734
        %v923 = vunpack.c.l.b16 %v735
        %v924 = vunpack.c.l.b16 %v736
        %v925 = vpack.c.b16 %v910, %v909
        %v926 = vpack.c.b16 %v912, %v911
        %v927 = vpack.c.b16 %v914, %v913
        %v928 = vpack.c.b16 %v916, %v915
        %v929 = vpack.c.b16 %v918, %v917
        %v930 = vpack.c.b16 %v920, %v919
        %v931 = vpack.c.b16 %v922, %v921
        %v932 = vpack.c.b16 %v924, %v923
        %941 = vmatpush.bf16.msra.mxu0 %v932
        %942 = vmatpush.bf16.msra.mxu0 %v931
        %943 = vmatpush.bf16.msra.mxu0 %v930
        %944 = vmatpush.bf16.msra.mxu0 %v929
        %945 = vmatpush.bf16.msra.mxu0 %v928
        %946 = vmatpush.bf16.msra.mxu0 %v927
        %947 = vmatpush.bf16.msra.mxu0 %v926
        %948 = vmatpush.bf16.msra.mxu0 %v925
        %949 = vmatmul.bf16.gmra.mxu0 %v351
        %v950 = vpop.f32.mrf.mxu0
        %v951 = vadd.f32 %v890, %v950
        %v952 = vpop.f32.mrf.mxu0
        %953 = vdwg.mxu0
        %v954 = vld [vmem:[#allocation12 + $0x188] sm:$0x1]
        %v955 = vunpack.c.l.bf16 %v954
        %v956 = vadd.f32 %v951, %v955
        %v957 = vmax.f32 %v956, 0.0
        %v958 = vld [vmem:[#allocation14] sm:$0xff]
        %v959 = vld [vmem:[#allocation14 + $0x8] sm:$0xff]
        %v960 = vld [vmem:[#allocation14 + $0x10] sm:$0xff]
        %v961 = vld [vmem:[#allocation14 + $0x18] sm:$0xff]
        %v962 = vld [vmem:[#allocation14 + $0x20] sm:$0xff]
        %v963 = vld [vmem:[#allocation14 + $0x28] sm:$0xff]
        %v964 = vld [vmem:[#allocation14 + $0x30] sm:$0xff]
        %v965 = vld [vmem:[#allocation14 + $0x38] sm:$0xff]
        %v966 = vld [vmem:[#allocation14 + $0x40] sm:$0xff]
        %v967 = vld [vmem:[#allocation14 + $0x48] sm:$0xff]
        %v968 = vld [vmem:[#allocation14 + $0x50] sm:$0xff]
        %v969 = vld [vmem:[#allocation14 + $0x58] sm:$0xff]
        %v970 = vld [vmem:[#allocation14 + $0x60] sm:$0xff]
        %v971 = vld [vmem:[#allocation14 + $0x68] sm:$0xff]
        %v972 = vld [vmem:[#allocation14 + $0x70] sm:$0xff]
        %v973 = vld [vmem:[#allocation14 + $0x78] sm:$0xff]
        %v974 = vld [vmem:[#allocation14 + $0x80] sm:$0xff]
        %v975 = vld [vmem:[#allocation14 + $0x88] sm:$0xff]
        %v976 = vld [vmem:[#allocation14 + $0x90] sm:$0xff]
        %v977 = vld [vmem:[#allocation14 + $0x98] sm:$0xff]
        %v978 = vld [vmem:[#allocation14 + $0xa0] sm:$0xff]
        %v979 = vld [vmem:[#allocation14 + $0xa8] sm:$0xff]
        %v980 = vld [vmem:[#allocation14 + $0xb0] sm:$0xff]
        %v981 = vld [vmem:[#allocation14 + $0xb8] sm:$0xff]
        %v982 = vld [vmem:[#allocation14 + $0xc0] sm:$0xff]
        %v983 = vld [vmem:[#allocation14 + $0xc8] sm:$0xff]
        %v984 = vld [vmem:[#allocation14 + $0xd0] sm:$0xff]
        %v985 = vld [vmem:[#allocation14 + $0xd8] sm:$0xff]
        %v986 = vld [vmem:[#allocation14 + $0xe0] sm:$0xff]
        %v987 = vld [vmem:[#allocation14 + $0xe8] sm:$0xff]
        %v988 = vld [vmem:[#allocation14 + $0xf0] sm:$0xff]
        %v989 = vld [vmem:[#allocation14 + $0xf8] sm:$0xff]
        %v990 = vpack.c.bf16 %v957, %v957
        %v991 = vld [vmem:[#allocation14 + $0x100] sm:$0xff]
        %v992 = vld [vmem:[#allocation14 + $0x108] sm:$0xff]
        %v993 = vld [vmem:[#allocation14 + $0x110] sm:$0xff]
        %v994 = vld [vmem:[#allocation14 + $0x118] sm:$0xff]
        %v995 = vld [vmem:[#allocation14 + $0x120] sm:$0xff]
        %v996 = vld [vmem:[#allocation14 + $0x128] sm:$0xff]
        %v997 = vld [vmem:[#allocation14 + $0x130] sm:$0xff]
        %v998 = vld [vmem:[#allocation14 + $0x138] sm:$0xff]
        %v999 = vld [vmem:[#allocation14 + $0x140] sm:$0xff]
        %v1000 = vld [vmem:[#allocation14 + $0x148] sm:$0xff]
        %v1001 = vld [vmem:[#allocation14 + $0x150] sm:$0xff]
        %v1002 = vld [vmem:[#allocation14 + $0x158] sm:$0xff]
        %v1003 = vld [vmem:[#allocation14 + $0x160] sm:$0xff]
        %v1004 = vld [vmem:[#allocation14 + $0x168] sm:$0xff]
        %v1005 = vld [vmem:[#allocation14 + $0x170] sm:$0xff]
        %v1006 = vld [vmem:[#allocation14 + $0x178] sm:$0xff]
        %v1007 = vld [vmem:[#allocation14 + $0x180] sm:$0xff]
        %v1008 = vld [vmem:[#allocation14 + $0x188] sm:$0xff]
        %v1009 = vld [vmem:[#allocation14 + $0x190] sm:$0xff]
        %v1010 = vld [vmem:[#allocation14 + $0x198] sm:$0xff]
        %v1011 = vld [vmem:[#allocation14 + $0x1a0] sm:$0xff]
        %v1012 = vld [vmem:[#allocation14 + $0x1a8] sm:$0xff]
        %v1013 = vld [vmem:[#allocation14 + $0x1b0] sm:$0xff]
        %v1014 = vld [vmem:[#allocation14 + $0x1b8] sm:$0xff]
        %v1015 = vld [vmem:[#allocation14 + $0x1c0] sm:$0xff]
        %v1016 = vld [vmem:[#allocation14 + $0x1c8] sm:$0xff]
        %v1017 = vld [vmem:[#allocation14 + $0x1d0] sm:$0xff]
        %v1018 = vld [vmem:[#allocation14 + $0x1d8] sm:$0xff]
        %v1019 = vld [vmem:[#allocation14 + $0x1e0] sm:$0xff]
        %v1020 = vld [vmem:[#allocation14 + $0x1e8] sm:$0xff]
        %v1021 = vld [vmem:[#allocation14 + $0x1f0] sm:$0xff]
        %v1022 = vld [vmem:[#allocation14 + $0x1f8] sm:$0xff]
        %v1055 = vunpack.c.l.b16 %v991
        %v1056 = vunpack.c.h.b16 %v991
        %v1057 = vunpack.c.l.b16 %v992
        %v1058 = vunpack.c.h.b16 %v992
        %v1059 = vunpack.c.l.b16 %v993
        %v1060 = vunpack.c.h.b16 %v993
        %v1061 = vunpack.c.l.b16 %v994
        %v1062 = vunpack.c.h.b16 %v994
        %v1063 = vunpack.c.l.b16 %v995
        %v1064 = vunpack.c.h.b16 %v995
        %v1065 = vunpack.c.l.b16 %v996
        %v1066 = vunpack.c.h.b16 %v996
        %v1067 = vunpack.c.l.b16 %v997
        %v1068 = vunpack.c.h.b16 %v997
        %v1069 = vunpack.c.l.b16 %v998
        %v1070 = vunpack.c.h.b16 %v998
        %v1071 = vunpack.c.l.b16 %v999
        %v1072 = vunpack.c.h.b16 %v999
        %v1073 = vunpack.c.l.b16 %v1000
        %v1074 = vunpack.c.h.b16 %v1000
        %v1075 = vunpack.c.l.b16 %v1001
        %v1076 = vunpack.c.h.b16 %v1001
        %v1077 = vunpack.c.l.b16 %v1002
        %v1078 = vunpack.c.h.b16 %v1002
        %v1079 = vunpack.c.l.b16 %v1003
        %v1080 = vunpack.c.h.b16 %v1003
        %v1081 = vunpack.c.l.b16 %v1004
        %v1082 = vunpack.c.h.b16 %v1004
        %v1083 = vunpack.c.l.b16 %v1005
        %v1084 = vunpack.c.h.b16 %v1005
        %v1085 = vunpack.c.l.b16 %v1006
        %v1086 = vunpack.c.h.b16 %v1006
        %v1087 = vunpack.c.l.b16 %v1007
        %v1088 = vunpack.c.h.b16 %v1007
        %v1089 = vunpack.c.l.b16 %v1008
        %v1090 = vunpack.c.h.b16 %v1008
        %v1091 = vunpack.c.l.b16 %v1009
        %v1092 = vunpack.c.h.b16 %v1009
        %v1093 = vunpack.c.l.b16 %v1010
        %v1094 = vunpack.c.h.b16 %v1010
        %v1095 = vunpack.c.l.b16 %v1011
        %v1096 = vunpack.c.h.b16 %v1011
        %v1097 = vunpack.c.l.b16 %v1012
        %v1098 = vunpack.c.h.b16 %v1012
        %v1099 = vunpack.c.l.b16 %v1013
        %v1100 = vunpack.c.h.b16 %v1013
        %v1101 = vunpack.c.l.b16 %v1014
        %v1102 = vunpack.c.h.b16 %v1014
        %v1103 = vunpack.c.l.b16 %v1015
        %v1104 = vunpack.c.h.b16 %v1015
        %v1105 = vunpack.c.l.b16 %v1016
        %v1106 = vunpack.c.h.b16 %v1016
        %v1107 = vunpack.c.l.b16 %v1017
        %v1108 = vunpack.c.h.b16 %v1017
        %v1109 = vunpack.c.l.b16 %v1018
        %v1110 = vunpack.c.h.b16 %v1018
        %v1111 = vunpack.c.l.b16 %v1019
        %v1112 = vunpack.c.h.b16 %v1019
        %v1113 = vunpack.c.l.b16 %v1020
        %v1114 = vunpack.c.h.b16 %v1020
        %v1115 = vunpack.c.l.b16 %v1021
        %v1116 = vunpack.c.h.b16 %v1021
        %v1117 = vunpack.c.l.b16 %v1022
        %v1118 = vunpack.c.h.b16 %v1022
        %v1119 = vpack.c.b16 %v1059, %v1055
        %v1120 = vpack.c.b16 %v1060, %v1056
        %v1121 = vpack.c.b16 %v1061, %v1057
        %v1122 = vpack.c.b16 %v1062, %v1058
        %v1123 = vpack.c.b16 %v1067, %v1063
        %v1124 = vpack.c.b16 %v1068, %v1064
        %v1125 = vpack.c.b16 %v1069, %v1065
        %v1126 = vpack.c.b16 %v1070, %v1066
        %v1127 = vpack.c.b16 %v1075, %v1071
        %v1128 = vpack.c.b16 %v1076, %v1072
        %v1129 = vpack.c.b16 %v1077, %v1073
        %v1130 = vpack.c.b16 %v1078, %v1074
        %v1131 = vpack.c.b16 %v1083, %v1079
        %v1132 = vpack.c.b16 %v1084, %v1080
        %v1133 = vpack.c.b16 %v1085, %v1081
        %v1134 = vpack.c.b16 %v1086, %v1082
        %v1135 = vpack.c.b16 %v1091, %v1087
        %v1136 = vpack.c.b16 %v1092, %v1088
        %v1137 = vpack.c.b16 %v1093, %v1089
        %v1138 = vpack.c.b16 %v1094, %v1090
        %v1139 = vpack.c.b16 %v1099, %v1095
        %v1140 = vpack.c.b16 %v1100, %v1096
        %v1141 = vpack.c.b16 %v1101, %v1097
        %v1142 = vpack.c.b16 %v1102, %v1098
        %v1143 = vpack.c.b16 %v1107, %v1103
        %v1144 = vpack.c.b16 %v1108, %v1104
        %v1145 = vpack.c.b16 %v1109, %v1105
        %v1146 = vpack.c.b16 %v1110, %v1106
        %v1147 = vpack.c.b16 %v1115, %v1111
        %v1148 = vpack.c.b16 %v1116, %v1112
        %v1149 = vpack.c.b16 %v1117, %v1113
        %v1150 = vpack.c.b16 %v1118, %v1114
        %1183 = vmatpush.bf16.msra.mxu0 %v1147
        %1184 = vmatpush.bf16.msra.mxu0 %v1143
        %1185 = vmatpush.bf16.msra.mxu0 %v1139
        %1186 = vmatpush.bf16.msra.mxu0 %v1135
        %1187 = vmatpush.bf16.msra.mxu0 %v1131
        %1188 = vmatpush.bf16.msra.mxu0 %v1127
        %1189 = vmatpush.bf16.msra.mxu0 %v1123
        %1190 = vmatpush.bf16.msra.mxu0 %v1119
        %1191 = vmatmul.bf16.gmra.mxu0 %v368
        %v1192 = vpop.f32.mrf.mxu0
        %v1193 = vadd.f32 0.0, %v1192
        %v1194 = vpop.f32.mrf.mxu0
        %1195 = vdwg.mxu0
        %1196 = vmatpush.bf16.msra.mxu0 %v1148
        %1197 = vmatpush.bf16.msra.mxu0 %v1144
        %1198 = vmatpush.bf16.msra.mxu0 %v1140
        %1199 = vmatpush.bf16.msra.mxu0 %v1136
        %1200 = vmatpush.bf16.msra.mxu0 %v1132
        %1201 = vmatpush.bf16.msra.mxu0 %v1128
        %1202 = vmatpush.bf16.msra.mxu0 %v1124
        %1203 = vmatpush.bf16.msra.mxu0 %v1120
        %1204 = vmatmul.bf16.gmra.mxu0 %v368
        %v1205 = vpop.f32.mrf.mxu0
        %v1206 = vadd.f32 0.0, %v1205
        %v1207 = vpop.f32.mrf.mxu0
        %1208 = vdwg.mxu0
        %1209 = vmatpush.bf16.msra.mxu0 %v1149
        %1210 = vmatpush.bf16.msra.mxu0 %v1145
        %1211 = vmatpush.bf16.msra.mxu0 %v1141
        %1212 = vmatpush.bf16.msra.mxu0 %v1137
        %1213 = vmatpush.bf16.msra.mxu0 %v1133
        %1214 = vmatpush.bf16.msra.mxu0 %v1129
        %1215 = vmatpush.bf16.msra.mxu0 %v1125
        %1216 = vmatpush.bf16.msra.mxu0 %v1121
        %1217 = vmatmul.bf16.gmra.mxu0 %v368
        %v1218 = vpop.f32.mrf.mxu0
        %v1219 = vadd.f32 0.0, %v1218
        %v1220 = vpop.f32.mrf.mxu0
        %1221 = vdwg.mxu0
        %1222 = vmatpush.bf16.msra.mxu0 %v1150
        %1223 = vmatpush.bf16.msra.mxu0 %v1146
        %1224 = vmatpush.bf16.msra.mxu0 %v1142
        %1225 = vmatpush.bf16.msra.mxu0 %v1138
        %1226 = vmatpush.bf16.msra.mxu0 %v1134
        %1227 = vmatpush.bf16.msra.mxu0 %v1130
        %1228 = vmatpush.bf16.msra.mxu0 %v1126
        %1229 = vmatpush.bf16.msra.mxu0 %v1122
        %1230 = vmatmul.bf16.gmra.mxu0 %v368
        %v1231 = vpop.f32.mrf.mxu0
        %v1232 = vadd.f32 0.0, %v1231
        %v1233 = vpop.f32.mrf.mxu0
        %1234 = vdwg.mxu0
        %v1267 = vunpack.c.l.b16 %v958
        %v1268 = vunpack.c.h.b16 %v958
        %v1269 = vunpack.c.l.b16 %v959
        %v1270 = vunpack.c.h.b16 %v959
        %v1271 = vunpack.c.l.b16 %v960
        %v1272 = vunpack.c.h.b16 %v960
        %v1273 = vunpack.c.l.b16 %v961
        %v1274 = vunpack.c.h.b16 %v961
        %v1275 = vunpack.c.l.b16 %v962
        %v1276 = vunpack.c.h.b16 %v962
        %v1277 = vunpack.c.l.b16 %v963
        %v1278 = vunpack.c.h.b16 %v963
        %v1279 = vunpack.c.l.b16 %v964
        %v1280 = vunpack.c.h.b16 %v964
        %v1281 = vunpack.c.l.b16 %v965
        %v1282 = vunpack.c.h.b16 %v965
        %v1283 = vunpack.c.l.b16 %v966
        %v1284 = vunpack.c.h.b16 %v966
        %v1285 = vunpack.c.l.b16 %v967
        %v1286 = vunpack.c.h.b16 %v967
        %v1287 = vunpack.c.l.b16 %v968
        %v1288 = vunpack.c.h.b16 %v968
        %v1289 = vunpack.c.l.b16 %v969
        %v1290 = vunpack.c.h.b16 %v969
        %v1291 = vunpack.c.l.b16 %v970
        %v1292 = vunpack.c.h.b16 %v970
        %v1293 = vunpack.c.l.b16 %v971
        %v1294 = vunpack.c.h.b16 %v971
        %v1295 = vunpack.c.l.b16 %v972
        %v1296 = vunpack.c.h.b16 %v972
        %v1297 = vunpack.c.l.b16 %v973
        %v1298 = vunpack.c.h.b16 %v973
        %v1299 = vunpack.c.l.b16 %v974
        %v1300 = vunpack.c.h.b16 %v974
        %v1301 = vunpack.c.l.b16 %v975
        %v1302 = vunpack.c.h.b16 %v975
        %v1303 = vunpack.c.l.b16 %v976
        %v1304 = vunpack.c.h.b16 %v976
        %v1305 = vunpack.c.l.b16 %v977
        %v1306 = vunpack.c.h.b16 %v977
        %v1307 = vunpack.c.l.b16 %v978
        %v1308 = vunpack.c.h.b16 %v978
        %v1309 = vunpack.c.l.b16 %v979
        %v1310 = vunpack.c.h.b16 %v979
        %v1311 = vunpack.c.l.b16 %v980
        %v1312 = vunpack.c.h.b16 %v980
        %v1313 = vunpack.c.l.b16 %v981
        %v1314 = vunpack.c.h.b16 %v981
        %v1315 = vunpack.c.l.b16 %v982
        %v1316 = vunpack.c.h.b16 %v982
        %v1317 = vunpack.c.l.b16 %v983
        %v1318 = vunpack.c.h.b16 %v983
        %v1319 = vunpack.c.l.b16 %v984
        %v1320 = vunpack.c.h.b16 %v984
        %v1321 = vunpack.c.l.b16 %v985
        %v1322 = vunpack.c.h.b16 %v985
        %v1323 = vunpack.c.l.b16 %v986
        %v1324 = vunpack.c.h.b16 %v986
        %v1325 = vunpack.c.l.b16 %v987
        %v1326 = vunpack.c.h.b16 %v987
        %v1327 = vunpack.c.l.b16 %v988
        %v1328 = vunpack.c.h.b16 %v988
        %v1329 = vunpack.c.l.b16 %v989
        %v1330 = vunpack.c.h.b16 %v989
        %v1331 = vpack.c.b16 %v1271, %v1267
        %v1332 = vpack.c.b16 %v1272, %v1268
        %v1333 = vpack.c.b16 %v1273, %v1269
        %v1334 = vpack.c.b16 %v1274, %v1270
        %v1335 = vpack.c.b16 %v1279, %v1275
        %v1336 = vpack.c.b16 %v1280, %v1276
        %v1337 = vpack.c.b16 %v1281, %v1277
        %v1338 = vpack.c.b16 %v1282, %v1278
        %v1339 = vpack.c.b16 %v1287, %v1283
        %v1340 = vpack.c.b16 %v1288, %v1284
        %v1341 = vpack.c.b16 %v1289, %v1285
        %v1342 = vpack.c.b16 %v1290, %v1286
        %v1343 = vpack.c.b16 %v1295, %v1291
        %v1344 = vpack.c.b16 %v1296, %v1292
        %v1345 = vpack.c.b16 %v1297, %v1293
        %v1346 = vpack.c.b16 %v1298, %v1294
        %v1347 = vpack.c.b16 %v1303, %v1299
        %v1348 = vpack.c.b16 %v1304, %v1300
        %v1349 = vpack.c.b16 %v1305, %v1301
        %v1350 = vpack.c.b16 %v1306, %v1302
        %v1351 = vpack.c.b16 %v1311, %v1307
        %v1352 = vpack.c.b16 %v1312, %v1308
        %v1353 = vpack.c.b16 %v1313, %v1309
        %v1354 = vpack.c.b16 %v1314, %v1310
        %v1355 = vpack.c.b16 %v1319, %v1315
        %v1356 = vpack.c.b16 %v1320, %v1316
        %v1357 = vpack.c.b16 %v1321, %v1317
        %v1358 = vpack.c.b16 %v1322, %v1318
        %v1359 = vpack.c.b16 %v1327, %v1323
        %v1360 = vpack.c.b16 %v1328, %v1324
        %v1361 = vpack.c.b16 %v1329, %v1325
        %v1362 = vpack.c.b16 %v1330, %v1326
        %1395 = vmatpush.bf16.msra.mxu0 %v1359
        %1396 = vmatpush.bf16.msra.mxu0 %v1355
        %1397 = vmatpush.bf16.msra.mxu0 %v1351
        %1398 = vmatpush.bf16.msra.mxu0 %v1347
        %1399 = vmatpush.bf16.msra.mxu0 %v1343
        %1400 = vmatpush.bf16.msra.mxu0 %v1339
        %1401 = vmatpush.bf16.msra.mxu0 %v1335
        %1402 = vmatpush.bf16.msra.mxu0 %v1331
        %1403 = vmatmul.bf16.gmra.mxu0 %v990
        %v1404 = vpop.f32.mrf.mxu0
        %v1405 = vadd.f32 %v1193, %v1404
        %v1406 = vpop.f32.mrf.mxu0
        %1407 = vdwg.mxu0
        %1408 = vmatpush.bf16.msra.mxu0 %v1360
        %1409 = vmatpush.bf16.msra.mxu0 %v1356
        %1410 = vmatpush.bf16.msra.mxu0 %v1352
        %1411 = vmatpush.bf16.msra.mxu0 %v1348
        %1412 = vmatpush.bf16.msra.mxu0 %v1344
        %1413 = vmatpush.bf16.msra.mxu0 %v1340
        %1414 = vmatpush.bf16.msra.mxu0 %v1336
        %1415 = vmatpush.bf16.msra.mxu0 %v1332
        %1416 = vmatmul.bf16.gmra.mxu0 %v990
        %v1417 = vpop.f32.mrf.mxu0
        %v1418 = vadd.f32 %v1206, %v1417
        %v1419 = vpop.f32.mrf.mxu0
        %1420 = vdwg.mxu0
        %1421 = vmatpush.bf16.msra.mxu0 %v1361
        %1422 = vmatpush.bf16.msra.mxu0 %v1357
        %1423 = vmatpush.bf16.msra.mxu0 %v1353
        %1424 = vmatpush.bf16.msra.mxu0 %v1349
        %1425 = vmatpush.bf16.msra.mxu0 %v1345
        %1426 = vmatpush.bf16.msra.mxu0 %v1341
        %1427 = vmatpush.bf16.msra.mxu0 %v1337
        %1428 = vmatpush.bf16.msra.mxu0 %v1333
        %1429 = vmatmul.bf16.gmra.mxu0 %v990
        %v1430 = vpop.f32.mrf.mxu0
        %v1431 = vadd.f32 %v1219, %v1430
        %v1432 = vpop.f32.mrf.mxu0
        %1433 = vdwg.mxu0
        %1434 = vmatpush.bf16.msra.mxu0 %v1362
        %1435 = vmatpush.bf16.msra.mxu0 %v1358
        %1436 = vmatpush.bf16.msra.mxu0 %v1354
        %1437 = vmatpush.bf16.msra.mxu0 %v1350
        %1438 = vmatpush.bf16.msra.mxu0 %v1346
        %1439 = vmatpush.bf16.msra.mxu0 %v1342
        %1440 = vmatpush.bf16.msra.mxu0 %v1338
        %1441 = vmatpush.bf16.msra.mxu0 %v1334
        %1442 = vmatmul.bf16.gmra.mxu0 %v990
        %v1443 = vpop.f32.mrf.mxu0
        %v1444 = vadd.f32 %v1232, %v1443
        %v1445 = vpop.f32.mrf.mxu0
        %1446 = vdwg.mxu0
        %v1447 = vld [vmem:[#allocation14 + $0x200] sm:$0x11]
        %v1448 = vld [vmem:[#allocation14 + $0x208] sm:$0x11]
        %v1449 = vunpack.c.l.bf16 %v1447
        %v1450 = vunpack.c.h.bf16 %v1447
        %v1451 = vunpack.c.l.bf16 %v1448
        %v1452 = vunpack.c.h.bf16 %v1448
        %v1453 = vadd.f32 %v1405, %v1449
        %v1454 = vadd.f32 %v1418, %v1450
        %v1455 = vadd.f32 %v1431, %v1451
        %v1456 = vadd.f32 %v1444, %v1452
        %v1457 = vmul.f32 %v1453, 0.5
        %v1458 = vtanh.pop %v1457
        %v1459 = vmul.f32 %v1458, 0.5
        %v1460 = vadd.f32 %v1459, 0.5
        %v1461 = vmul.f32 %v1454, 0.5
        %v1462 = vtanh.pop %v1461
        %v1463 = vmul.f32 %v1462, 0.5
        %v1464 = vadd.f32 %v1463, 0.5
        %v1465 = vtanh.pop %v1455
        %v1466 = vmul.f32 %v1456, 0.5
        %v1467 = vtanh.pop %v1466
        %v1468 = vmul.f32 %v1467, 0.5
        %v1469 = vadd.f32 %v1468, 0.5
        %v1470 = vmul.f32 %v1464, %v333
        %v1471 = vmul.f32 %v1460, %v1465
        %v1472 = vadd.f32 %v1470, %v1471
        %v1473 = vtanh.pop %v1472
        %v1474 = vmul.f32 %v1469, %v1473
        %v1475 = vld [vmem:[#allocation14 + $0x220] sm:$0xff]
        %v1476 = vld [vmem:[#allocation14 + $0x228] sm:$0xff]
        %v1477 = vld [vmem:[#allocation14 + $0x230] sm:$0xff]
        %v1478 = vld [vmem:[#allocation14 + $0x238] sm:$0xff]
        %v1479 = vld [vmem:[#allocation14 + $0x240] sm:$0xff]
        %v1480 = vld [vmem:[#allocation14 + $0x248] sm:$0xff]
        %v1481 = vld [vmem:[#allocation14 + $0x250] sm:$0xff]
        %v1482 = vld [vmem:[#allocation14 + $0x258] sm:$0xff]
        %v1483 = vld [vmem:[#allocation14 + $0x260] sm:$0xff]
        %v1484 = vld [vmem:[#allocation14 + $0x268] sm:$0xff]
        %v1485 = vld [vmem:[#allocation14 + $0x270] sm:$0xff]
        %v1486 = vld [vmem:[#allocation14 + $0x278] sm:$0xff]
        %v1487 = vld [vmem:[#allocation14 + $0x280] sm:$0xff]
        %v1488 = vld [vmem:[#allocation14 + $0x288] sm:$0xff]
        %v1489 = vld [vmem:[#allocation14 + $0x290] sm:$0xff]
        %v1490 = vld [vmem:[#allocation14 + $0x298] sm:$0xff]
        %v1491 = vld [vmem:[#allocation14 + $0x2a0] sm:$0xff]
        %v1492 = vld [vmem:[#allocation14 + $0x2a8] sm:$0xff]
        %v1493 = vld [vmem:[#allocation14 + $0x2b0] sm:$0xff]
        %v1494 = vld [vmem:[#allocation14 + $0x2b8] sm:$0xff]
        %v1495 = vld [vmem:[#allocation14 + $0x2c0] sm:$0xff]
        %v1496 = vld [vmem:[#allocation14 + $0x2c8] sm:$0xff]
        %v1497 = vld [vmem:[#allocation14 + $0x2d0] sm:$0xff]
        %v1498 = vld [vmem:[#allocation14 + $0x2d8] sm:$0xff]
        %v1499 = vld [vmem:[#allocation14 + $0x2e0] sm:$0xff]
        %v1500 = vld [vmem:[#allocation14 + $0x2e8] sm:$0xff]
        %v1501 = vld [vmem:[#allocation14 + $0x2f0] sm:$0xff]
        %v1502 = vld [vmem:[#allocation14 + $0x2f8] sm:$0xff]
        %v1503 = vld [vmem:[#allocation14 + $0x300] sm:$0xff]
        %v1504 = vld [vmem:[#allocation14 + $0x308] sm:$0xff]
        %v1505 = vld [vmem:[#allocation14 + $0x310] sm:$0xff]
        %v1506 = vld [vmem:[#allocation14 + $0x318] sm:$0xff]
        %v1507 = vpack.c.bf16 %v1474, %v1474
        %v1508 = vld [vmem:[#allocation14 + $0x320] sm:$0xff]
        %v1509 = vld [vmem:[#allocation14 + $0x328] sm:$0xff]
        %v1510 = vld [vmem:[#allocation14 + $0x330] sm:$0xff]
        %v1511 = vld [vmem:[#allocation14 + $0x338] sm:$0xff]
        %v1512 = vld [vmem:[#allocation14 + $0x340] sm:$0xff]
        %v1513 = vld [vmem:[#allocation14 + $0x348] sm:$0xff]
        %v1514 = vld [vmem:[#allocation14 + $0x350] sm:$0xff]
        %v1515 = vld [vmem:[#allocation14 + $0x358] sm:$0xff]
        %v1516 = vld [vmem:[#allocation14 + $0x360] sm:$0xff]
        %v1517 = vld [vmem:[#allocation14 + $0x368] sm:$0xff]
        %v1518 = vld [vmem:[#allocation14 + $0x370] sm:$0xff]
        %v1519 = vld [vmem:[#allocation14 + $0x378] sm:$0xff]
        %v1520 = vld [vmem:[#allocation14 + $0x380] sm:$0xff]
        %v1521 = vld [vmem:[#allocation14 + $0x388] sm:$0xff]
        %v1522 = vld [vmem:[#allocation14 + $0x390] sm:$0xff]
        %v1523 = vld [vmem:[#allocation14 + $0x398] sm:$0xff]
        %v1524 = vld [vmem:[#allocation14 + $0x3a0] sm:$0xff]
        %v1525 = vld [vmem:[#allocation14 + $0x3a8] sm:$0xff]
        %v1526 = vld [vmem:[#allocation14 + $0x3b0] sm:$0xff]
        %v1527 = vld [vmem:[#allocation14 + $0x3b8] sm:$0xff]
        %v1528 = vld [vmem:[#allocation14 + $0x3c0] sm:$0xff]
        %v1529 = vld [vmem:[#allocation14 + $0x3c8] sm:$0xff]
        %v1530 = vld [vmem:[#allocation14 + $0x3d0] sm:$0xff]
        %v1531 = vld [vmem:[#allocation14 + $0x3d8] sm:$0xff]
        %v1532 = vld [vmem:[#allocation14 + $0x3e0] sm:$0xff]
        %v1533 = vld [vmem:[#allocation14 + $0x3e8] sm:$0xff]
        %v1534 = vld [vmem:[#allocation14 + $0x3f0] sm:$0xff]
        %v1535 = vld [vmem:[#allocation14 + $0x3f8] sm:$0xff]
        %v1536 = vld [vmem:[#allocation14 + $0x400] sm:$0xff]
        %v1537 = vld [vmem:[#allocation14 + $0x408] sm:$0xff]
        %v1538 = vld [vmem:[#allocation14 + $0x410] sm:$0xff]
        %v1539 = vld [vmem:[#allocation14 + $0x418] sm:$0xff]
        %v1572 = vunpack.c.l.b16 %v1508
        %v1573 = vunpack.c.h.b16 %v1508
        %v1574 = vunpack.c.l.b16 %v1509
        %v1575 = vunpack.c.h.b16 %v1509
        %v1576 = vunpack.c.l.b16 %v1510
        %v1577 = vunpack.c.h.b16 %v1510
        %v1578 = vunpack.c.l.b16 %v1511
        %v1579 = vunpack.c.h.b16 %v1511
        %v1580 = vunpack.c.l.b16 %v1512
        %v1581 = vunpack.c.h.b16 %v1512
        %v1582 = vunpack.c.l.b16 %v1513
        %v1583 = vunpack.c.h.b16 %v1513
        %v1584 = vunpack.c.l.b16 %v1514
        %v1585 = vunpack.c.h.b16 %v1514
        %v1586 = vunpack.c.l.b16 %v1515
        %v1587 = vunpack.c.h.b16 %v1515
        %v1588 = vunpack.c.l.b16 %v1516
        %v1589 = vunpack.c.h.b16 %v1516
        %v1590 = vunpack.c.l.b16 %v1517
        %v1591 = vunpack.c.h.b16 %v1517
        %v1592 = vunpack.c.l.b16 %v1518
        %v1593 = vunpack.c.h.b16 %v1518
        %v1594 = vunpack.c.l.b16 %v1519
        %v1595 = vunpack.c.h.b16 %v1519
        %v1596 = vunpack.c.l.b16 %v1520
        %v1597 = vunpack.c.h.b16 %v1520
        %v1598 = vunpack.c.l.b16 %v1521
        %v1599 = vunpack.c.h.b16 %v1521
        %v1600 = vunpack.c.l.b16 %v1522
        %v1601 = vunpack.c.h.b16 %v1522
        %v1602 = vunpack.c.l.b16 %v1523
        %v1603 = vunpack.c.h.b16 %v1523
        %v1604 = vunpack.c.l.b16 %v1524
        %v1605 = vunpack.c.h.b16 %v1524
        %v1606 = vunpack.c.l.b16 %v1525
        %v1607 = vunpack.c.h.b16 %v1525
        %v1608 = vunpack.c.l.b16 %v1526
        %v1609 = vunpack.c.h.b16 %v1526
        %v1610 = vunpack.c.l.b16 %v1527
        %v1611 = vunpack.c.h.b16 %v1527
        %v1612 = vunpack.c.l.b16 %v1528
        %v1613 = vunpack.c.h.b16 %v1528
        %v1614 = vunpack.c.l.b16 %v1529
        %v1615 = vunpack.c.h.b16 %v1529
        %v1616 = vunpack.c.l.b16 %v1530
        %v1617 = vunpack.c.h.b16 %v1530
        %v1618 = vunpack.c.l.b16 %v1531
        %v1619 = vunpack.c.h.b16 %v1531
        %v1620 = vunpack.c.l.b16 %v1532
        %v1621 = vunpack.c.h.b16 %v1532
        %v1622 = vunpack.c.l.b16 %v1533
        %v1623 = vunpack.c.h.b16 %v1533
        %v1624 = vunpack.c.l.b16 %v1534
        %v1625 = vunpack.c.h.b16 %v1534
        %v1626 = vunpack.c.l.b16 %v1535
        %v1627 = vunpack.c.h.b16 %v1535
        %v1628 = vunpack.c.l.b16 %v1536
        %v1629 = vunpack.c.h.b16 %v1536
        %v1630 = vunpack.c.l.b16 %v1537
        %v1631 = vunpack.c.h.b16 %v1537
        %v1632 = vunpack.c.l.b16 %v1538
        %v1633 = vunpack.c.h.b16 %v1538
        %v1634 = vunpack.c.l.b16 %v1539
        %v1635 = vunpack.c.h.b16 %v1539
        %v1636 = vpack.c.b16 %v1576, %v1572
        %v1637 = vpack.c.b16 %v1577, %v1573
        %v1638 = vpack.c.b16 %v1578, %v1574
        %v1639 = vpack.c.b16 %v1579, %v1575
        %v1640 = vpack.c.b16 %v1584, %v1580
        %v1641 = vpack.c.b16 %v1585, %v1581
        %v1642 = vpack.c.b16 %v1586, %v1582
        %v1643 = vpack.c.b16 %v1587, %v1583
        %v1644 = vpack.c.b16 %v1592, %v1588
        %v1645 = vpack.c.b16 %v1593, %v1589
        %v1646 = vpack.c.b16 %v1594, %v1590
        %v1647 = vpack.c.b16 %v1595, %v1591
        %v1648 = vpack.c.b16 %v1600, %v1596
        %v1649 = vpack.c.b16 %v1601, %v1597
        %v1650 = vpack.c.b16 %v1602, %v1598
        %v1651 = vpack.c.b16 %v1603, %v1599
        %v1652 = vpack.c.b16 %v1608, %v1604
        %v1653 = vpack.c.b16 %v1609, %v1605
        %v1654 = vpack.c.b16 %v1610, %v1606
        %v1655 = vpack.c.b16 %v1611, %v1607
        %v1656 = vpack.c.b16 %v1616, %v1612
        %v1657 = vpack.c.b16 %v1617, %v1613
        %v1658 = vpack.c.b16 %v1618, %v1614
        %v1659 = vpack.c.b16 %v1619, %v1615
        %v1660 = vpack.c.b16 %v1624, %v1620
        %v1661 = vpack.c.b16 %v1625, %v1621
        %v1662 = vpack.c.b16 %v1626, %v1622
        %v1663 = vpack.c.b16 %v1627, %v1623
        %v1664 = vpack.c.b16 %v1632, %v1628
        %v1665 = vpack.c.b16 %v1633, %v1629
        %v1666 = vpack.c.b16 %v1634, %v1630
        %v1667 = vpack.c.b16 %v1635, %v1631
        %1700 = vmatpush.bf16.msra.mxu0 %v1664
        %1701 = vmatpush.bf16.msra.mxu0 %v1660
        %1702 = vmatpush.bf16.msra.mxu0 %v1656
        %1703 = vmatpush.bf16.msra.mxu0 %v1652
        %1704 = vmatpush.bf16.msra.mxu0 %v1648
        %1705 = vmatpush.bf16.msra.mxu0 %v1644
        %1706 = vmatpush.bf16.msra.mxu0 %v1640
        %1707 = vmatpush.bf16.msra.mxu0 %v1636
        %1708 = vmatmul.bf16.gmra.mxu0 %v507
        %v1709 = vpop.f32.mrf.mxu0
        %v1710 = vadd.f32 0.0, %v1709
        %v1711 = vpop.f32.mrf.mxu0
        %1712 = vdwg.mxu0
        %1713 = vmatpush.bf16.msra.mxu0 %v1665
        %1714 = vmatpush.bf16.msra.mxu0 %v1661
        %1715 = vmatpush.bf16.msra.mxu0 %v1657
        %1716 = vmatpush.bf16.msra.mxu0 %v1653
        %1717 = vmatpush.bf16.msra.mxu0 %v1649
        %1718 = vmatpush.bf16.msra.mxu0 %v1645
        %1719 = vmatpush.bf16.msra.mxu0 %v1641
        %1720 = vmatpush.bf16.msra.mxu0 %v1637
        %1721 = vmatmul.bf16.gmra.mxu0 %v507
        %v1722 = vpop.f32.mrf.mxu0
        %v1723 = vadd.f32 0.0, %v1722
        %v1724 = vpop.f32.mrf.mxu0
        %1725 = vdwg.mxu0
        %1726 = vmatpush.bf16.msra.mxu0 %v1666
        %1727 = vmatpush.bf16.msra.mxu0 %v1662
        %1728 = vmatpush.bf16.msra.mxu0 %v1658
        %1729 = vmatpush.bf16.msra.mxu0 %v1654
        %1730 = vmatpush.bf16.msra.mxu0 %v1650
        %1731 = vmatpush.bf16.msra.mxu0 %v1646
        %1732 = vmatpush.bf16.msra.mxu0 %v1642
        %1733 = vmatpush.bf16.msra.mxu0 %v1638
        %1734 = vmatmul.bf16.gmra.mxu0 %v507
        %v1735 = vpop.f32.mrf.mxu0
        %v1736 = vadd.f32 0.0, %v1735
        %v1737 = vpop.f32.mrf.mxu0
        %1738 = vdwg.mxu0
        %1739 = vmatpush.bf16.msra.mxu0 %v1667
        %1740 = vmatpush.bf16.msra.mxu0 %v1663
        %1741 = vmatpush.bf16.msra.mxu0 %v1659
        %1742 = vmatpush.bf16.msra.mxu0 %v1655
        %1743 = vmatpush.bf16.msra.mxu0 %v1651
        %1744 = vmatpush.bf16.msra.mxu0 %v1647
        %1745 = vmatpush.bf16.msra.mxu0 %v1643
        %1746 = vmatpush.bf16.msra.mxu0 %v1639
        %1747 = vmatmul.bf16.gmra.mxu0 %v507
        %v1748 = vpop.f32.mrf.mxu0
        %v1749 = vadd.f32 0.0, %v1748
        %v1750 = vpop.f32.mrf.mxu0
        %1751 = vdwg.mxu0
        %v1784 = vunpack.c.l.b16 %v1475
        %v1785 = vunpack.c.h.b16 %v1475
        %v1786 = vunpack.c.l.b16 %v1476
        %v1787 = vunpack.c.h.b16 %v1476
        %v1788 = vunpack.c.l.b16 %v1477
        %v1789 = vunpack.c.h.b16 %v1477
        %v1790 = vunpack.c.l.b16 %v1478
        %v1791 = vunpack.c.h.b16 %v1478
        %v1792 = vunpack.c.l.b16 %v1479
        %v1793 = vunpack.c.h.b16 %v1479
        %v1794 = vunpack.c.l.b16 %v1480
        %v1795 = vunpack.c.h.b16 %v1480
        %v1796 = vunpack.c.l.b16 %v1481
        %v1797 = vunpack.c.h.b16 %v1481
        %v1798 = vunpack.c.l.b16 %v1482
        %v1799 = vunpack.c.h.b16 %v1482
        %v1800 = vunpack.c.l.b16 %v1483
        %v1801 = vunpack.c.h.b16 %v1483
        %v1802 = vunpack.c.l.b16 %v1484
        %v1803 = vunpack.c.h.b16 %v1484
        %v1804 = vunpack.c.l.b16 %v1485
        %v1805 = vunpack.c.h.b16 %v1485
        %v1806 = vunpack.c.l.b16 %v1486
        %v1807 = vunpack.c.h.b16 %v1486
        %v1808 = vunpack.c.l.b16 %v1487
        %v1809 = vunpack.c.h.b16 %v1487
        %v1810 = vunpack.c.l.b16 %v1488
        %v1811 = vunpack.c.h.b16 %v1488
        %v1812 = vunpack.c.l.b16 %v1489
        %v1813 = vunpack.c.h.b16 %v1489
        %v1814 = vunpack.c.l.b16 %v1490
        %v1815 = vunpack.c.h.b16 %v1490
        %v1816 = vunpack.c.l.b16 %v1491
        %v1817 = vunpack.c.h.b16 %v1491
        %v1818 = vunpack.c.l.b16 %v1492
        %v1819 = vunpack.c.h.b16 %v1492
        %v1820 = vunpack.c.l.b16 %v1493
        %v1821 = vunpack.c.h.b16 %v1493
        %v1822 = vunpack.c.l.b16 %v1494
        %v1823 = vunpack.c.h.b16 %v1494
        %v1824 = vunpack.c.l.b16 %v1495
        %v1825 = vunpack.c.h.b16 %v1495
        %v1826 = vunpack.c.l.b16 %v1496
        %v1827 = vunpack.c.h.b16 %v1496
        %v1828 = vunpack.c.l.b16 %v1497
        %v1829 = vunpack.c.h.b16 %v1497
        %v1830 = vunpack.c.l.b16 %v1498
        %v1831 = vunpack.c.h.b16 %v1498
        %v1832 = vunpack.c.l.b16 %v1499
        %v1833 = vunpack.c.h.b16 %v1499
        %v1834 = vunpack.c.l.b16 %v1500
        %v1835 = vunpack.c.h.b16 %v1500
        %v1836 = vunpack.c.l.b16 %v1501
        %v1837 = vunpack.c.h.b16 %v1501
        %v1838 = vunpack.c.l.b16 %v1502
        %v1839 = vunpack.c.h.b16 %v1502
        %v1840 = vunpack.c.l.b16 %v1503
        %v1841 = vunpack.c.h.b16 %v1503
        %v1842 = vunpack.c.l.b16 %v1504
        %v1843 = vunpack.c.h.b16 %v1504
        %v1844 = vunpack.c.l.b16 %v1505
        %v1845 = vunpack.c.h.b16 %v1505
        %v1846 = vunpack.c.l.b16 %v1506
        %v1847 = vunpack.c.h.b16 %v1506
        %v1848 = vpack.c.b16 %v1788, %v1784
        %v1849 = vpack.c.b16 %v1789, %v1785
        %v1850 = vpack.c.b16 %v1790, %v1786
        %v1851 = vpack.c.b16 %v1791, %v1787
        %v1852 = vpack.c.b16 %v1796, %v1792
        %v1853 = vpack.c.b16 %v1797, %v1793
        %v1854 = vpack.c.b16 %v1798, %v1794
        %v1855 = vpack.c.b16 %v1799, %v1795
        %v1856 = vpack.c.b16 %v1804, %v1800
        %v1857 = vpack.c.b16 %v1805, %v1801
        %v1858 = vpack.c.b16 %v1806, %v1802
        %v1859 = vpack.c.b16 %v1807, %v1803
        %v1860 = vpack.c.b16 %v1812, %v1808
        %v1861 = vpack.c.b16 %v1813, %v1809
        %v1862 = vpack.c.b16 %v1814, %v1810
        %v1863 = vpack.c.b16 %v1815, %v1811
        %v1864 = vpack.c.b16 %v1820, %v1816
        %v1865 = vpack.c.b16 %v1821, %v1817
        %v1866 = vpack.c.b16 %v1822, %v1818
        %v1867 = vpack.c.b16 %v1823, %v1819
        %v1868 = vpack.c.b16 %v1828, %v1824
        %v1869 = vpack.c.b16 %v1829, %v1825
        %v1870 = vpack.c.b16 %v1830, %v1826
        %v1871 = vpack.c.b16 %v1831, %v1827
        %v1872 = vpack.c.b16 %v1836, %v1832
        %v1873 = vpack.c.b16 %v1837, %v1833
        %v1874 = vpack.c.b16 %v1838, %v1834
        %v1875 = vpack.c.b16 %v1839, %v1835
        %v1876 = vpack.c.b16 %v1844, %v1840
        %v1877 = vpack.c.b16 %v1845, %v1841
        %v1878 = vpack.c.b16 %v1846, %v1842
        %v1879 = vpack.c.b16 %v1847, %v1843
        %1912 = vmatpush.bf16.msra.mxu0 %v1876
        %1913 = vmatpush.bf16.msra.mxu0 %v1872
        %1914 = vmatpush.bf16.msra.mxu0 %v1868
        %1915 = vmatpush.bf16.msra.mxu0 %v1864
        %1916 = vmatpush.bf16.msra.mxu0 %v1860
        %1917 = vmatpush.bf16.msra.mxu0 %v1856
        %1918 = vmatpush.bf16.msra.mxu0 %v1852
        %1919 = vmatpush.bf16.msra.mxu0 %v1848
        %1920 = vmatmul.bf16.gmra.mxu0 %v1507
        %v1921 = vpop.f32.mrf.mxu0
        %v1922 = vadd.f32 %v1710, %v1921
        %v1923 = vpop.f32.mrf.mxu0
        %1924 = vdwg.mxu0
        %1925 = vmatpush.bf16.msra.mxu0 %v1877
        %1926 = vmatpush.bf16.msra.mxu0 %v1873
        %1927 = vmatpush.bf16.msra.mxu0 %v1869
        %1928 = vmatpush.bf16.msra.mxu0 %v1865
        %1929 = vmatpush.bf16.msra.mxu0 %v1861
        %1930 = vmatpush.bf16.msra.mxu0 %v1857
        %1931 = vmatpush.bf16.msra.mxu0 %v1853
        %1932 = vmatpush.bf16.msra.mxu0 %v1849
        %1933 = vmatmul.bf16.gmra.mxu0 %v1507
        %v1934 = vpop.f32.mrf.mxu0
        %v1935 = vadd.f32 %v1723, %v1934
        %v1936 = vpop.f32.mrf.mxu0
        %1937 = vdwg.mxu0
        %1938 = vmatpush.bf16.msra.mxu0 %v1878
        %1939 = vmatpush.bf16.msra.mxu0 %v1874
        %1940 = vmatpush.bf16.msra.mxu0 %v1870
        %1941 = vmatpush.bf16.msra.mxu0 %v1866
        %1942 = vmatpush.bf16.msra.mxu0 %v1862
        %1943 = vmatpush.bf16.msra.mxu0 %v1858
        %1944 = vmatpush.bf16.msra.mxu0 %v1854
        %1945 = vmatpush.bf16.msra.mxu0 %v1850
        %1946 = vmatmul.bf16.gmra.mxu0 %v1507
        %v1947 = vpop.f32.mrf.mxu0
        %v1948 = vadd.f32 %v1736, %v1947
        %v1949 = vpop.f32.mrf.mxu0
        %1950 = vdwg.mxu0
        %1951 = vmatpush.bf16.msra.mxu0 %v1879
        %1952 = vmatpush.bf16.msra.mxu0 %v1875
        %1953 = vmatpush.bf16.msra.mxu0 %v1871
        %1954 = vmatpush.bf16.msra.mxu0 %v1867
        %1955 = vmatpush.bf16.msra.mxu0 %v1863
        %1956 = vmatpush.bf16.msra.mxu0 %v1859
        %1957 = vmatpush.bf16.msra.mxu0 %v1855
        %1958 = vmatpush.bf16.msra.mxu0 %v1851
        %1959 = vmatmul.bf16.gmra.mxu0 %v1507
        %v1960 = vpop.f32.mrf.mxu0
        %v1961 = vadd.f32 %v1749, %v1960
        %v1962 = vpop.f32.mrf.mxu0
        %1963 = vdwg.mxu0
        %v1964 = vld [vmem:[#allocation14 + $0x420] sm:$0x11]
        %v1965 = vld [vmem:[#allocation14 + $0x428] sm:$0x11]
        %v1966 = vunpack.c.l.bf16 %v1964
        %v1967 = vunpack.c.h.bf16 %v1964
        %v1968 = vunpack.c.l.bf16 %v1965
        %v1969 = vunpack.c.h.bf16 %v1965
        %v1970 = vadd.f32 %v1922, %v1966
        %v1971 = vadd.f32 %v1935, %v1967
        %v1972 = vadd.f32 %v1948, %v1968
        %v1973 = vadd.f32 %v1961, %v1969
        %v1974 = vmul.f32 %v1970, 0.5
        %v1975 = vtanh.pop %v1974
        %v1976 = vmul.f32 %v1975, 0.5
        %v1977 = vadd.f32 %v1976, 0.5
        %v1978 = vmul.f32 %v1971, 0.5
        %v1979 = vtanh.pop %v1978
        %v1980 = vmul.f32 %v1979, 0.5
        %v1981 = vadd.f32 %v1980, 0.5
        %v1982 = vtanh.pop %v1972
        %v1983 = vmul.f32 %v1973, 0.5
        %v1984 = vtanh.pop %v1983
        %v1985 = vmul.f32 %v1984, 0.5
        %v1986 = vadd.f32 %v1985, 0.5
        %v1987 = vmul.f32 %v1981, %v334
        %v1988 = vmul.f32 %v1977, %v1982
        %v1989 = vadd.f32 %v1987, %v1988
        %v1990 = vtanh.pop %v1989
        %v1991 = vmul.f32 %v1986, %v1990
        %v1993 = vrot.slane %v1991, 7
        %v1995 = vsel %vm573, %v1474, %v1993
        %1996 = vst [vmem:[#allocation2] sm:$0x3] %v1995
        %v1998 = vrot.slane %v1989, 7
        %v2000 = vsel %vm573, %v1472, %v1998
        %2001 = vst [vmem:[#allocation3] sm:$0x3] %v2000
        %v2002 = vld [vmem:[#allocation12 + $0x190] sm:$0xf]
        %v2003 = vld [vmem:[#allocation12 + $0x194] sm:$0xf]
        %v2004 = vld [vmem:[#allocation12 + $0x198] sm:$0xf]
        %v2005 = vld [vmem:[#allocation12 + $0x19c] sm:$0xf]
        %v2006 = vld [vmem:[#allocation12 + $0x1a0] sm:$0xf]
        %v2007 = vld [vmem:[#allocation12 + $0x1a4] sm:$0xf]
        %v2008 = vld [vmem:[#allocation12 + $0x1a8] sm:$0xf]
        %v2009 = vld [vmem:[#allocation12 + $0x1ac] sm:$0xf]
        %v2010 = vld [vmem:[#allocation12 + $0x1b0] sm:$0xf]
        %v2011 = vld [vmem:[#allocation12 + $0x1b4] sm:$0xf]
        %v2012 = vld [vmem:[#allocation12 + $0x1b8] sm:$0xf]
        %v2013 = vld [vmem:[#allocation12 + $0x1bc] sm:$0xf]
        %v2014 = vld [vmem:[#allocation12 + $0x1c0] sm:$0xf]
        %v2015 = vld [vmem:[#allocation12 + $0x1c4] sm:$0xf]
        %v2016 = vld [vmem:[#allocation12 + $0x1c8] sm:$0xf]
        %v2017 = vld [vmem:[#allocation12 + $0x1cc] sm:$0xf]
        %v2018 = vpack.c.bf16 %v1991, %v1991
        %v2019 = vld [vmem:[#allocation12 + $0x1d0] sm:$0x1]
        %v2020 = vunpack.c.l.bf16 %v2019
        %v2037 = vunpack.c.l.b16 %v2002
        %v2038 = vunpack.c.l.b16 %v2003
        %v2039 = vunpack.c.l.b16 %v2004
        %v2040 = vunpack.c.l.b16 %v2005
        %v2041 = vunpack.c.l.b16 %v2006
        %v2042 = vunpack.c.l.b16 %v2007
        %v2043 = vunpack.c.l.b16 %v2008
        %v2044 = vunpack.c.l.b16 %v2009
        %v2045 = vunpack.c.l.b16 %v2010
        %v2046 = vunpack.c.l.b16 %v2011
        %v2047 = vunpack.c.l.b16 %v2012
        %v2048 = vunpack.c.l.b16 %v2013
        %v2049 = vunpack.c.l.b16 %v2014
        %v2050 = vunpack.c.l.b16 %v2015
        %v2051 = vunpack.c.l.b16 %v2016
        %v2052 = vunpack.c.l.b16 %v2017
        %v2053 = vpack.c.b16 %v2038, %v2037
        %v2054 = vpack.c.b16 %v2040, %v2039
        %v2055 = vpack.c.b16 %v2042, %v2041
        %v2056 = vpack.c.b16 %v2044, %v2043
        %v2057 = vpack.c.b16 %v2046, %v2045
        %v2058 = vpack.c.b16 %v2048, %v2047
        %v2059 = vpack.c.b16 %v2050, %v2049
        %v2060 = vpack.c.b16 %v2052, %v2051
        %2069 = vmatpush.bf16.msra.mxu0 %v2060
        %2070 = vmatpush.bf16.msra.mxu0 %v2059
        %2071 = vmatpush.bf16.msra.mxu0 %v2058
        %2072 = vmatpush.bf16.msra.mxu0 %v2057
        %2073 = vmatpush.bf16.msra.mxu0 %v2056
        %2074 = vmatpush.bf16.msra.mxu0 %v2055
        %2075 = vmatpush.bf16.msra.mxu0 %v2054
        %2076 = vmatpush.bf16.msra.mxu0 %v2053
        %2077 = vmatmul.bf16.gmra.mxu0 %v2018
        %v2078 = vpop.f32.mrf.mxu0
        %v2079 = vadd.f32 %v2020, %v2078
        %v2080 = vpop.f32.mrf.mxu0
        %2081 = vdwg.mxu0
        %v2082 = vsel %vm573, %v2079, -inf
        %2083 = vmax.xlane.f32.xlu0 %v2082
        %v2084 = vpop.xlane.xlu0 %2083
        %v2085 = vsub.f32 %v2079, %v2084
        %v2086 = vmul.f32 %v2085, 1.442695
        %v2087 = vpow.pop %v2086
        %v2088 = vsel %vm573, %v2087, 0.0
        %2089 = vadd.xlane.f32.xlu0 %v2088
        %v2090 = vpop.xlane.xlu0 %2089
        %v2091 = vlog2.pop %v2090
        %v2092 = vmul.f32 %v2091, 0.6931472
        %v2093 = vsub.f32 %v2085, %v2092
        %v2095 = vrot.slane %v597, 7
        %v2098 = vrot.slane %v1474, 6
        %v2100 = vrot.slane %v1991, 5
        %v2103 = vrot.slane %v1472, 4
        %v2105 = vrot.slane %v1989, 3
        %v2107 = vsel %vm573, %v2093, %v2095
        %vm2108 = vcmask 1041408
        %v2109 = vsel %vm2108, %v2107, %v2098
        %vm2110 = vcmask 1042432
        %v2111 = vsel %vm2110, %v2109, %v2100
        %vm2112 = vcmask 1043456
        %v2113 = vsel %vm2112, %v2111, %v2103
        %vm2114 = vcmask 1044480
        %v2115 = vsel %vm2114, %v2113, %v2105
        %vm2116 = vcmask 1045504
        %v2117 = vsel %vm2116, %v2115, 0.0
        %2118 = vst [vmem:[%s319] sm:$0xff] %v2117
        %s2119 = sand.u32 %s166, 1
        %s2120 = scalar_lea.sflag [#allocation8], %s2119
        %s2121 = sand.u32 %s166, 1
        %s2122 = smul.addr %s2121, 8
        %s2123 = scalar_lea.vmem [#allocation15], %s2122
        // Predicated region
        $region69: #{tpu_custom_call.1} parent=43 // pred_check
          %p2124 = pneg %p176
        $region70: #{tpu_custom_call.1} parent=43 // pred_check_branch
          %2126 = sbr.rel (%p2124) target = $region72
        $region71: #{tpu_custom_call.1} parent=43 // pred_region
          %2128 = vsyncadd %s2120, 0
          %s2129 = smul.addr %s32, 8
          %s2130 = scalar_lea.hbm %s7, %s2129
          %s2132 = sshll.u32 %s2123, 4
          %s2133 = int_to_ptr.vmem [resolvable:$true] %s2132
          %s2134 = sshll.u32 %s2130, 4
          %s2135 = int_to_ptr.hbm [resolvable:$true] %s2134
          %2137 = dma.vmem_to_hbm [thread:$0]  %s2133, 128, %s2135, %s2120
        $region72: #{tpu_custom_call.1} parent=43 // pred_fallthru
          _
      $region44: #{tpu_custom_call.1} parent=5 // pred_fallthru
        _
      %p2138 = scmp.le.s32.totalorder 2, %s27
      // Predicated region
      $region73: #{tpu_custom_call.1} parent=5 // pred_check
        %p2139 = pneg %p2138
      $region74: #{tpu_custom_call.1} parent=5 // pred_check_branch
        %2141 = sbr.rel (%p2139) target = $region76
      $region75: #{tpu_custom_call.1} parent=5 // pred_region
        %s2142 = ssub.s32 %s27, 2
        // Predicated region
        $region77: #{tpu_custom_call.1} parent=75 // pred_check
          %p2143 = pneg %p182
        $region78: #{tpu_custom_call.1} parent=75 // pred_check_branch
          %2145 = sbr.rel (%p2143) target = $region80
        $region79: #{tpu_custom_call.1} parent=75 // pred_region
          %s2146 = sand.u32 %s167, 1
          %s2147 = scalar_lea.sflag [#allocation8], %s2146
          %s2148 = sand.u32 %s167, 1
          %s2149 = smul.addr %s2148, 8
          %s2150 = scalar_lea.vmem [#allocation15], %s2149
          %2152 = dma.done %s2147, 128
        $region80: #{tpu_custom_call.1} parent=75 // pred_fallthru
          _
      $region76: #{tpu_custom_call.1} parent=5 // pred_fallthru
        _
    $region6: #{tpu_custom_call.1} parent=1 // loop_footer
      %s31 = sadd.s32 1, %s27
    $region7: #{tpu_custom_call.1} parent=1 // loop_footer_branch
      %26 = sbr.rel target = $region3
    $region8: #{tpu_custom_call.1} parent=1 // loop_exit
      _
    %2153 = vsyncpa [#allocation7], 1
    %s2154 = scalar_lea.sflag [#allocation7], 1
    %2155 = vsyncpa %s2154, 1
    %2156 = vsyncpa [#allocation10], 1
    %2157 = vsyncpa [#allocation13], 1
    %2158 = vsyncpa [#allocation8], 1
    %s2159 = scalar_lea.sflag [#allocation8], 1
    %2160 = vsyncpa %s2159, 1

</llo_original>
